<compile_context>
chip_gen: v7x
topology: tpu7x:2x2x1
jax: 0.10.0
libtpu: 0.0.40
codegen_flags: <defaults>
</compile_context>

<pallas_src>
import numpy as np
import jax
import jax.numpy as jnp
from jax.experimental import pallas as pl
from jax.experimental.pallas import tpu as pltpu

NBACTIONS = 4
ADDINPUT = 4
RFSIZE = 3
TOTALNBINPUTS = RFSIZE * RFSIZE + ADDINPUT + NBACTIONS  # 17

_LANE = 128
_SUB = 8
_HEAD = 128  # packed head width: cols [0:4] = action probs, col [4] = value


def _round_up(n, m):
    return ((n + m - 1) // m) * m


def _pad2(a, shape):
    out = jnp.zeros(shape, jnp.float32)
    return out.at[: a.shape[0], : a.shape[1]].set(a.astype(jnp.float32))


def _rollout_kernel(x_ref, h0_ref, hebb0_ref,
                    wi_ref, bi_ref, w_ref, alpha_ref, eta_ref,
                    whead_ref, bhead_ref,
                    out_ref, h_ref, hebb_ref):
    """Whole T-step rollout in a single kernel invocation (no grid).

    Weights are loaded once (VMEM resident); the recurrent state (h, hebb)
    is carried through a fori_loop in vregs and written back exactly once.
    """
    T = x_ref.shape[0]
    HS = w_ref.shape[0]          # sublane-padded hidden size (multiple of 8)
    eta = eta_ref[0, 0]          # scalar plasticity learning rate (SMEM)

    wi = wi_ref[...]             # (INL, HL)
    bi = bi_ref[...]             # (1, HL)
    w = w_ref[...]               # (HS, HL)
    alpha = alpha_ref[...]       # (HS, HL)
    whead = whead_ref[...]       # (HL, _HEAD)
    bhead = bhead_ref[...]       # (1, _HEAD)

    # Hoisted softmax / packing masks (computed once, closed over by the loop).
    col = jax.lax.broadcasted_iota(jnp.int32, (1, _HEAD), 1)
    act_mask = col < NBACTIONS
    val_mask = col == NBACTIONS

    def step(t, carry):
        h, hebb = carry                              # (1, HL), (HS, HL)
        x = x_ref[pl.ds(t, 1), :]                    # (1, INL)
        h_c = h[:, :HS]                              # contraction slice (1, HS)

        # hactiv = tanh(i2h(x) + h @ (w + alpha * hebb))
        w_eff = w + alpha * hebb                     # (HS, HL) -- shrunk sublanes
        pre = (jnp.dot(x, wi, preferred_element_type=jnp.float32) + bi
               + jnp.dot(h_c, w_eff, preferred_element_type=jnp.float32))
        hact = jnp.tanh(pre)                         # (1, HL); padded lanes stay 0

        # hebb <- (1 - eta) * hebb + eta * outer(h_old, hactiv)
        # rank-1 outer product on the MXU (transposed-LHS dot_general) instead
        # of an XLU transpose + VPU broadcast multiply.
        outer = jax.lax.dot_general(
            h_c, hact, (((0,), (0,)), ((), ())),
            preferred_element_type=jnp.float32)      # (HS, HL)
        hebb = (1.0 - eta) * hebb + eta * outer

        # fused policy / value head: whead[:, :4] = h2o.T, whead[:, 4] = h2v.T
        logits = jnp.dot(hact, whead, preferred_element_type=jnp.float32) + bhead
        act_logits = jnp.where(act_mask, logits, -1e30)
        m = jnp.max(act_logits, axis=-1, keepdims=True)
        e = jnp.where(act_mask, jnp.exp(act_logits - m), 0.0)
        # exact normalization (approx reciprocal broke sum-to-one by ~2e-3)
        probs = e / jnp.sum(e, axis=-1, keepdims=True)
        packed = jnp.where(act_mask, probs, jnp.where(val_mask, logits, 0.0))
        out_ref[pl.ds(t, 1), :] = packed
        return hact, hebb

    unroll = True if T <= 16 else 8
    h_fin, hebb_fin = jax.lax.fori_loop(
        0, T, step, (h0_ref[...], hebb0_ref[...]), unroll=unroll)
    h_ref[...] = h_fin
    hebb_ref[...] = hebb_fin


def plastic_rollout(xs, hidden, hebb, params):
    """Run T timesteps of the plastic/hebb/tanh network in ONE pallas_call.

    xs:     (T, TOTALNBINPUTS)   observation sequence
    hidden: (1, H)               initial hidden state
    hebb:   (H, H)               initial Hebbian trace
    Returns (activout (T, NBACTIONS), valueout (T, 1),
             hidden_new (1, H), hebb_new (H, H)).
    """
    T, IN = xs.shape
    H = hidden.shape[1]
    HS = _round_up(H, _SUB)      # sublane padding (trace / recurrent weights)
    HL = _round_up(H, _LANE)     # lane padding (hidden state / head inputs)
    INL = _round_up(IN, _LANE)   # wi stays 128-sublane: resident, fully amortized

    # Lane-dense, zero-padded operands.  Padding is numerically exact: padded
    # lanes/sublanes of the hidden state and Hebbian trace stay identically
    # zero through the recurrence.
    xp = jnp.zeros((T, INL), jnp.float32).at[:, :IN].set(xs.astype(jnp.float32))
    h0 = _pad2(hidden, (1, HL))
    hb0 = _pad2(hebb, (HS, HL))
    wi = _pad2(params['wi'], (INL, HL))
    bi = _pad2(params['bi'], (1, HL))
    w = _pad2(params['w'], (HS, HL))
    alpha = _pad2(params['alpha'], (HS, HL))
    whead = jnp.zeros((HL, _HEAD), jnp.float32)
    whead = whead.at[:H, :NBACTIONS].set(params['wo'])
    whead = whead.at[:H, NBACTIONS:NBACTIONS + 1].set(params['wv'])
    bhead = jnp.zeros((1, _HEAD), jnp.float32)
    bhead = bhead.at[:, :NBACTIONS].set(params['bo'])
    bhead = bhead.at[:, NBACTIONS:NBACTIONS + 1].set(params['bv'])
    eta = params['eta'].reshape(1, 1).astype(jnp.float32)

    vmem = pl.BlockSpec(memory_space=pltpu.MemorySpace.VMEM)
    smem = pl.BlockSpec(memory_space=pltpu.MemorySpace.SMEM)

    out_shapes = (
        jax.ShapeDtypeStruct((T, _HEAD), jnp.float32),  # packed act/value per step
        jax.ShapeDtypeStruct((1, HL), jnp.float32),     # final hidden
        jax.ShapeDtypeStruct((HS, HL), jnp.float32),    # final hebb
    )

    packed, hfin, hebbfin = pl.pallas_call(
        _rollout_kernel,
        out_shape=out_shapes,
        in_specs=[vmem, vmem, vmem, vmem, vmem, vmem, vmem, smem, vmem, vmem],
        out_specs=(vmem, vmem, vmem),
    )(xp, h0, hb0, wi, bi, w, alpha, eta, whead, bhead)

    act = packed[:, :NBACTIONS]
    val = packed[:, NBACTIONS:NBACTIONS + 1]
    return act, val, hfin[:, :H], hebbfin[:H, :H]


def plastic_forward(x, hidden, hebb, params):
    """Single-step API matching the PyTorch forward's return tuple."""
    return plastic_rollout(x.reshape(1, -1), hidden, hebb, params)


def ref_rollout(xs, hidden, hebb, p):
    """Pure-JAX reference reproducing the PyTorch semantics, stepped over xs."""
    acts, vals = [], []
    eta = p['eta'][0, 0]
    for t in range(xs.shape[0]):
        x = xs[t:t + 1]
        hact = jnp.tanh(x @ p['wi'] + p['bi'] + hidden @ (p['w'] + p['alpha'] * hebb))
        hebb = (1.0 - eta) * hebb + eta * (hidden.T @ hact)
        hidden = hact
        acts.append(jax.nn.softmax(hact @ p['wo'] + p['bo'], axis=1))
        vals.append(hact @ p['wv'] + p['bv'])
    return jnp.concatenate(acts, 0), jnp.concatenate(vals, 0), hidden, hebb


def init_params(key, hiddensize):
    H = hiddensize
    IN = TOTALNBINPUTS
    ks = jax.random.split(key, 8)
    # i2h: PyTorch Linear(IN, H) -> stored transposed as (IN, H)
    bound_i = 1.0 / np.sqrt(IN)
    wi = jax.random.uniform(ks[0], (IN, H), jnp.float32, -bound_i, bound_i)
    bi = jax.random.uniform(ks[1], (1, H), jnp.float32, -bound_i, bound_i)
    # plastic recurrent params: 0.01 * rand(H, H)
    w = 0.01 * jax.random.uniform(ks[2], (H, H), jnp.float32)
    alpha = 0.01 * jax.random.uniform(ks[3], (H, H), jnp.float32)
    eta = jnp.full((1, 1), 0.01, dtype=jnp.float32)
    # heads: h2o Linear(H, NBACTIONS), h2v Linear(H, 1) (stored transposed)
    bound_h = 1.0 / np.sqrt(H)
    wo = jax.random.uniform(ks[4], (H, NBACTIONS), jnp.float32, -bound_h, bound_h)
    bo = jax.random.uniform(ks[5], (1, NBACTIONS), jnp.float32, -bound_h, bound_h)
    wv = jax.random.uniform(ks[6], (H, 1), jnp.float32, -bound_h, bound_h)
    bv = jax.random.uniform(ks[7], (1, 1), jnp.float32, -bound_h, bound_h)
    return dict(wi=wi, bi=bi, w=w, alpha=alpha, eta=eta, wo=wo, bo=bo, wv=wv, bv=bv)


if __name__ == "__main__":
    H = 32
    T = 8
    key = jax.random.PRNGKey(0)
    kp, kx = jax.random.split(key)

    params = init_params(kp, H)
    xs = jax.random.uniform(kx, (T, TOTALNBINPUTS), jnp.float32)
    hidden0 = jnp.zeros((1, H), jnp.float32)
    hebb0 = jnp.zeros((H, H), jnp.float32)

    rollout = jax.jit(plastic_rollout)

    # Two chained rollouts so the second one starts from non-zero hidden/hebb
    # state (exercises the plasticity path through the kernel).
    a1, v1, h1, hb1 = rollout(xs[: T // 2], hidden0, hebb0, params)
    a2, v2, h2, hb2 = rollout(xs[T // 2:], h1, hb1, params)
    jax.block_until_ready((a2, v2, h2, hb2))

    # correctness vs pure-JAX reference of the PyTorch forward
    ra1, rv1, rh1, rhb1 = ref_rollout(xs[: T // 2], hidden0, hebb0, params)
    ra2, rv2, rh2, rhb2 = ref_rollout(xs[T // 2:], rh1, rhb1, params)

    np.testing.assert_allclose(np.asarray(h2), np.asarray(rh2), rtol=1e-5, atol=1e-5)
    np.testing.assert_allclose(np.asarray(hb2), np.asarray(rhb2), rtol=1e-5, atol=1e-5)
    np.testing.assert_allclose(
        np.asarray(jnp.concatenate([v1, v2], 0)),
        np.asarray(jnp.concatenate([rv1, rv2], 0)), rtol=1e-5, atol=1e-5)
    np.testing.assert_allclose(
        np.asarray(jnp.concatenate([a1, a2], 0)),
        np.asarray(jnp.concatenate([ra1, ra2], 0)), rtol=1e-5, atol=1e-5)
    # exact softmax normalization: probabilities sum to 1 to fp32 precision
    np.testing.assert_allclose(np.asarray(a2).sum(axis=1), np.ones(T // 2),
                               rtol=1e-5, atol=1e-5)

    print("KERNEL_OK")
</pallas_src>

<mosaic_0001>
module attributes {stable_mosaic.version = 11 : i64} {
  func.func @_rollout_kernel(%arg0: memref<4x128xf32, #tpu.memory_space<vmem>>, %arg1: memref<1x128xf32, #tpu.memory_space<vmem>>, %arg2: memref<32x128xf32, #tpu.memory_space<vmem>>, %arg3: memref<128x128xf32, #tpu.memory_space<vmem>>, %arg4: memref<1x128xf32, #tpu.memory_space<vmem>>, %arg5: memref<32x128xf32, #tpu.memory_space<vmem>>, %arg6: memref<32x128xf32, #tpu.memory_space<vmem>>, %arg7: memref<1x1xf32, #tpu.memory_space<smem>>, %arg8: memref<128x128xf32, #tpu.memory_space<vmem>>, %arg9: memref<1x128xf32, #tpu.memory_space<vmem>>, %arg10: memref<4x128xf32, #tpu.memory_space<vmem>>, %arg11: memref<1x128xf32, #tpu.memory_space<vmem>>, %arg12: memref<32x128xf32, #tpu.memory_space<vmem>>) attributes {dimension_semantics = [], scalar_prefetch = 0 : i64, scratch_operands = 0 : i64, tpu.core_type = #tpu.core_type<tc>} {
    %c0 = arith.constant 0 : index
    %c0_0 = arith.constant 0 : index
    %0 = memref.load %arg7[%c0, %c0_0] : memref<1x1xf32, #tpu.memory_space<smem>>
    %c0_1 = arith.constant 0 : index
    %c0_2 = arith.constant 0 : index
    %1 = vector.load %arg3[%c0_1, %c0_2] : memref<128x128xf32, #tpu.memory_space<vmem>>, vector<128x128xf32>
    %c0_3 = arith.constant 0 : index
    %c0_4 = arith.constant 0 : index
    %2 = vector.load %arg4[%c0_3, %c0_4] : memref<1x128xf32, #tpu.memory_space<vmem>>, vector<1x128xf32>
    %c0_5 = arith.constant 0 : index
    %c0_6 = arith.constant 0 : index
    %3 = vector.load %arg5[%c0_5, %c0_6] : memref<32x128xf32, #tpu.memory_space<vmem>>, vector<32x128xf32>
    %c0_7 = arith.constant 0 : index
    %c0_8 = arith.constant 0 : index
    %4 = vector.load %arg6[%c0_7, %c0_8] : memref<32x128xf32, #tpu.memory_space<vmem>>, vector<32x128xf32>
    %c0_9 = arith.constant 0 : index
    %c0_10 = arith.constant 0 : index
    %5 = vector.load %arg8[%c0_9, %c0_10] : memref<128x128xf32, #tpu.memory_space<vmem>>, vector<128x128xf32>
    %c0_11 = arith.constant 0 : index
    %c0_12 = arith.constant 0 : index
    %6 = vector.load %arg9[%c0_11, %c0_12] : memref<1x128xf32, #tpu.memory_space<vmem>>, vector<1x128xf32>
    %7 = tpu.iota {dimensions = array<i32: 1>} : vector<1x128xi32>
    %c4_i32 = arith.constant 4 : i32
    %8 = vector.broadcast %c4_i32 : i32 to vector<1x128xi32>
    %9 = arith.cmpi slt, %7, %8 : vector<1x128xi32>
    %c4_i32_13 = arith.constant 4 : i32
    %10 = vector.broadcast %c4_i32_13 : i32 to vector<1x128xi32>
    %11 = arith.cmpi eq, %7, %10 : vector<1x128xi32>
    %c0_14 = arith.constant 0 : index
    %c0_15 = arith.constant 0 : index
    %12 = vector.load %arg1[%c0_14, %c0_15] : memref<1x128xf32, #tpu.memory_space<vmem>>, vector<1x128xf32>
    %c0_16 = arith.constant 0 : index
    %c0_17 = arith.constant 0 : index
    %13 = vector.load %arg2[%c0_16, %c0_17] : memref<32x128xf32, #tpu.memory_space<vmem>>, vector<32x128xf32>
    %c0_i32 = arith.constant 0 : i32
    %14 = arith.index_cast %c0_i32 : i32 to index
    %c0_18 = arith.constant 0 : index
    %15 = vector.load %arg0[%14, %c0_18] : memref<4x128xf32, #tpu.memory_space<vmem>>, vector<1x128xf32>
    %16 = vector.extract_strided_slice %12 {offsets = [0, 0], sizes = [1, 32], strides = [1, 1]} : vector<1x128xf32> to vector<1x32xf32>
    %17 = arith.mulf %4, %13 : vector<32x128xf32>
    %18 = arith.addf %3, %17 : vector<32x128xf32>
    %cst = arith.constant dense<0.000000e+00> : vector<1x128xf32>
    %19 = tpu.matmul %15, %1, %cst {dimension_numbers = #tpu.dot_dimension_numbers<[1], [0], [0], [1], [0, 0, 1, 1], [], []>} : vector<1x128xf32>, vector<128x128xf32>, vector<1x128xf32> -> vector<1x128xf32>
    %20 = arith.addf %19, %2 : vector<1x128xf32>
    %cst_19 = arith.constant dense<0.000000e+00> : vector<1x128xf32>
    %21 = tpu.matmul %16, %18, %cst_19 {dimension_numbers = #tpu.dot_dimension_numbers<[1], [0], [0], [1], [0, 0, 1, 1], [], []>} : vector<1x32xf32>, vector<32x128xf32>, vector<1x128xf32> -> vector<1x128xf32>
    %22 = arith.addf %20, %21 : vector<1x128xf32>
    %23 = math.tanh %22 : vector<1x128xf32>
    %cst_20 = arith.constant dense<0.000000e+00> : vector<32x128xf32>
    %24 = tpu.matmul %16, %23, %cst_20 {dimension_numbers = #tpu.dot_dimension_numbers<[0], [0], [1], [1], [0, 1, 1, 1], [], []>} : vector<1x32xf32>, vector<1x128xf32>, vector<32x128xf32> -> vector<32x128xf32>
    %cst_21 = arith.constant 1.000000e+00 : f32
    %25 = arith.subf %cst_21, %0 : f32
    %26 = vector.broadcast %25 : f32 to vector<32x128xf32>
    %27 = arith.mulf %26, %13 : vector<32x128xf32>
    %28 = vector.broadcast %0 : f32 to vector<32x128xf32>
    %29 = arith.mulf %28, %24 : vector<32x128xf32>
    %30 = arith.addf %27, %29 : vector<32x128xf32>
    %cst_22 = arith.constant dense<0.000000e+00> : vector<1x128xf32>
    %31 = tpu.matmul %23, %5, %cst_22 {dimension_numbers = #tpu.dot_dimension_numbers<[1], [0], [0], [1], [0, 0, 1, 1], [], []>} : vector<1x128xf32>, vector<128x128xf32>, vector<1x128xf32> -> vector<1x128xf32>
    %32 = arith.addf %31, %6 : vector<1x128xf32>
    %cst_23 = arith.constant -1.000000e+30 : f32
    %33 = vector.broadcast %cst_23 : f32 to vector<1x128xf32>
    %34 = arith.select %9, %32, %33 : vector<1x128xi1>, vector<1x128xf32>
    %cst_24 = arith.constant dense<0xFF800000> : vector<1xf32>
    %35 = vector.multi_reduction <maximumf>, %34, %cst_24 [1] : vector<1x128xf32> to vector<1xf32>
    %36 = vector.shape_cast %35 : vector<1xf32> to vector<1x1xf32>
    %37 = vector.broadcast %36 : vector<1x1xf32> to vector<1x128xf32>
    %38 = arith.subf %34, %37 : vector<1x128xf32>
    %39 = math.exp %38 : vector<1x128xf32>
    %cst_25 = arith.constant 0.000000e+00 : f32
    %40 = vector.broadcast %cst_25 : f32 to vector<1x128xf32>
    %41 = arith.select %9, %39, %40 : vector<1x128xi1>, vector<1x128xf32>
    %cst_26 = arith.constant dense<0.000000e+00> : vector<1xf32>
    %42 = vector.multi_reduction <add>, %41, %cst_26 [1] : vector<1x128xf32> to vector<1xf32>
    %43 = vector.shape_cast %42 : vector<1xf32> to vector<1x1xf32>
    %44 = vector.broadcast %43 : vector<1x1xf32> to vector<1x128xf32>
    %45 = arith.divf %41, %44 : vector<1x128xf32>
    %cst_27 = arith.constant 0.000000e+00 : f32
    %46 = vector.broadcast %cst_27 : f32 to vector<1x128xf32>
    %47 = arith.select %11, %32, %46 : vector<1x128xi1>, vector<1x128xf32>
    %48 = arith.select %9, %45, %47 : vector<1x128xi1>, vector<1x128xf32>
    %49 = arith.index_cast %c0_i32 : i32 to index
    %c0_28 = arith.constant 0 : index
    %50 = vector.load %arg10[%49, %c0_28] : memref<4x128xf32, #tpu.memory_space<vmem>>, vector<1x128xf32>
    tpu.vector_store %arg10[%49, %c0_28], %48 {strides = array<i32>} : memref<4x128xf32, #tpu.memory_space<vmem>>, vector<1x128xf32>,
    %c1_i32 = arith.constant 1 : i32
    %51 = arith.index_cast %c1_i32 : i32 to index
    %c0_29 = arith.constant 0 : index
    %52 = vector.load %arg0[%51, %c0_29] : memref<4x128xf32, #tpu.memory_space<vmem>>, vector<1x128xf32>
    %53 = vector.extract_strided_slice %23 {offsets = [0, 0], sizes = [1, 32], strides = [1, 1]} : vector<1x128xf32> to vector<1x32xf32>
    %54 = arith.mulf %4, %30 : vector<32x128xf32>
    %55 = arith.addf %3, %54 : vector<32x128xf32>
    %cst_30 = arith.constant dense<0.000000e+00> : vector<1x128xf32>
    %56 = tpu.matmul %52, %1, %cst_30 {dimension_numbers = #tpu.dot_dimension_numbers<[1], [0], [0], [1], [0, 0, 1, 1], [], []>} : vector<1x128xf32>, vector<128x128xf32>, vector<1x128xf32> -> vector<1x128xf32>
    %57 = arith.addf %56, %2 : vector<1x128xf32>
    %cst_31 = arith.constant dense<0.000000e+00> : vector<1x128xf32>
    %58 = tpu.matmul %53, %55, %cst_31 {dimension_numbers = #tpu.dot_dimension_numbers<[1], [0], [0], [1], [0, 0, 1, 1], [], []>} : vector<1x32xf32>, vector<32x128xf32>, vector<1x128xf32> -> vector<1x128xf32>
    %59 = arith.addf %57, %58 : vector<1x128xf32>
    %60 = math.tanh %59 : vector<1x128xf32>
    %cst_32 = arith.constant dense<0.000000e+00> : vector<32x128xf32>
    %61 = tpu.matmul %53, %60, %cst_32 {dimension_numbers = #tpu.dot_dimension_numbers<[0], [0], [1], [1], [0, 1, 1, 1], [], []>} : vector<1x32xf32>, vector<1x128xf32>, vector<32x128xf32> -> vector<32x128xf32>
    %cst_33 = arith.constant 1.000000e+00 : f32
    %62 = arith.subf %cst_33, %0 : f32
    %63 = vector.broadcast %62 : f32 to vector<32x128xf32>
    %64 = arith.mulf %63, %30 : vector<32x128xf32>
    %65 = vector.broadcast %0 : f32 to vector<32x128xf32>
    %66 = arith.mulf %65, %61 : vector<32x128xf32>
    %67 = arith.addf %64, %66 : vector<32x128xf32>
    %cst_34 = arith.constant dense<0.000000e+00> : vector<1x128xf32>
    %68 = tpu.matmul %60, %5, %cst_34 {dimension_numbers = #tpu.dot_dimension_numbers<[1], [0], [0], [1], [0, 0, 1, 1], [], []>} : vector<1x128xf32>, vector<128x128xf32>, vector<1x128xf32> -> vector<1x128xf32>
    %69 = arith.addf %68, %6 : vector<1x128xf32>
    %cst_35 = arith.constant -1.000000e+30 : f32
    %70 = vector.broadcast %cst_35 : f32 to vector<1x128xf32>
    %71 = arith.select %9, %69, %70 : vector<1x128xi1>, vector<1x128xf32>
    %cst_36 = arith.constant dense<0xFF800000> : vector<1xf32>
    %72 = vector.multi_reduction <maximumf>, %71, %cst_36 [1] : vector<1x128xf32> to vector<1xf32>
    %73 = vector.shape_cast %72 : vector<1xf32> to vector<1x1xf32>
    %74 = vector.broadcast %73 : vector<1x1xf32> to vector<1x128xf32>
    %75 = arith.subf %71, %74 : vector<1x128xf32>
    %76 = math.exp %75 : vector<1x128xf32>
    %cst_37 = arith.constant 0.000000e+00 : f32
    %77 = vector.broadcast %cst_37 : f32 to vector<1x128xf32>
    %78 = arith.select %9, %76, %77 : vector<1x128xi1>, vector<1x128xf32>
    %cst_38 = arith.constant dense<0.000000e+00> : vector<1xf32>
    %79 = vector.multi_reduction <add>, %78, %cst_38 [1] : vector<1x128xf32> to vector<1xf32>
    %80 = vector.shape_cast %79 : vector<1xf32> to vector<1x1xf32>
    %81 = vector.broadcast %80 : vector<1x1xf32> to vector<1x128xf32>
    %82 = arith.divf %78, %81 : vector<1x128xf32>
    %cst_39 = arith.constant 0.000000e+00 : f32
    %83 = vector.broadcast %cst_39 : f32 to vector<1x128xf32>
    %84 = arith.select %11, %69, %83 : vector<1x128xi1>, vector<1x128xf32>
    %85 = arith.select %9, %82, %84 : vector<1x128xi1>, vector<1x128xf32>
    %86 = arith.index_cast %c1_i32 : i32 to index
    %c0_40 = arith.constant 0 : index
    %87 = vector.load %arg10[%86, %c0_40] : memref<4x128xf32, #tpu.memory_space<vmem>>, vector<1x128xf32>
    tpu.vector_store %arg10[%86, %c0_40], %85 {strides = array<i32>} : memref<4x128xf32, #tpu.memory_space<vmem>>, vector<1x128xf32>,
    %c2_i32 = arith.constant 2 : i32
    %88 = arith.index_cast %c2_i32 : i32 to index
    %c0_41 = arith.constant 0 : index
    %89 = vector.load %arg0[%88, %c0_41] : memref<4x128xf32, #tpu.memory_space<vmem>>, vector<1x128xf32>
    %90 = vector.extract_strided_slice %60 {offsets = [0, 0], sizes = [1, 32], strides = [1, 1]} : vector<1x128xf32> to vector<1x32xf32>
    %91 = arith.mulf %4, %67 : vector<32x128xf32>
    %92 = arith.addf %3, %91 : vector<32x128xf32>
    %cst_42 = arith.constant dense<0.000000e+00> : vector<1x128xf32>
    %93 = tpu.matmul %89, %1, %cst_42 {dimension_numbers = #tpu.dot_dimension_numbers<[1], [0], [0], [1], [0, 0, 1, 1], [], []>} : vector<1x128xf32>, vector<128x128xf32>, vector<1x128xf32> -> vector<1x128xf32>
    %94 = arith.addf %93, %2 : vector<1x128xf32>
    %cst_43 = arith.constant dense<0.000000e+00> : vector<1x128xf32>
    %95 = tpu.matmul %90, %92, %cst_43 {dimension_numbers = #tpu.dot_dimension_numbers<[1], [0], [0], [1], [0, 0, 1, 1], [], []>} : vector<1x32xf32>, vector<32x128xf32>, vector<1x128xf32> -> vector<1x128xf32>
    %96 = arith.addf %94, %95 : vector<1x128xf32>
    %97 = math.tanh %96 : vector<1x128xf32>
    %cst_44 = arith.constant dense<0.000000e+00> : vector<32x128xf32>
    %98 = tpu.matmul %90, %97, %cst_44 {dimension_numbers = #tpu.dot_dimension_numbers<[0], [0], [1], [1], [0, 1, 1, 1], [], []>} : vector<1x32xf32>, vector<1x128xf32>, vector<32x128xf32> -> vector<32x128xf32>
    %cst_45 = arith.constant 1.000000e+00 : f32
    %99 = arith.subf %cst_45, %0 : f32
    %100 = vector.broadcast %99 : f32 to vector<32x128xf32>
    %101 = arith.mulf %100, %67 : vector<32x128xf32>
    %102 = vector.broadcast %0 : f32 to vector<32x128xf32>
    %103 = arith.mulf %102, %98 : vector<32x128xf32>
    %104 = arith.addf %101, %103 : vector<32x128xf32>
    %cst_46 = arith.constant dense<0.000000e+00> : vector<1x128xf32>
    %105 = tpu.matmul %97, %5, %cst_46 {dimension_numbers = #tpu.dot_dimension_numbers<[1], [0], [0], [1], [0, 0, 1, 1], [], []>} : vector<1x128xf32>, vector<128x128xf32>, vector<1x128xf32> -> vector<1x128xf32>
    %106 = arith.addf %105, %6 : vector<1x128xf32>
    %cst_47 = arith.constant -1.000000e+30 : f32
    %107 = vector.broadcast %cst_47 : f32 to vector<1x128xf32>
    %108 = arith.select %9, %106, %107 : vector<1x128xi1>, vector<1x128xf32>
    %cst_48 = arith.constant dense<0xFF800000> : vector<1xf32>
    %109 = vector.multi_reduction <maximumf>, %108, %cst_48 [1] : vector<1x128xf32> to vector<1xf32>
    %110 = vector.shape_cast %109 : vector<1xf32> to vector<1x1xf32>
    %111 = vector.broadcast %110 : vector<1x1xf32> to vector<1x128xf32>
    %112 = arith.subf %108, %111 : vector<1x128xf32>
    %113 = math.exp %112 : vector<1x128xf32>
    %cst_49 = arith.constant 0.000000e+00 : f32
    %114 = vector.broadcast %cst_49 : f32 to vector<1x128xf32>
    %115 = arith.select %9, %113, %114 : vector<1x128xi1>, vector<1x128xf32>
    %cst_50 = arith.constant dense<0.000000e+00> : vector<1xf32>
    %116 = vector.multi_reduction <add>, %115, %cst_50 [1] : vector<1x128xf32> to vector<1xf32>
    %117 = vector.shape_cast %116 : vector<1xf32> to vector<1x1xf32>
    %118 = vector.broadcast %117 : vector<1x1xf32> to vector<1x128xf32>
    %119 = arith.divf %115, %118 : vector<1x128xf32>
    %cst_51 = arith.constant 0.000000e+00 : f32
    %120 = vector.broadcast %cst_51 : f32 to vector<1x128xf32>
    %121 = arith.select %11, %106, %120 : vector<1x128xi1>, vector<1x128xf32>
    %122 = arith.select %9, %119, %121 : vector<1x128xi1>, vector<1x128xf32>
    %123 = arith.index_cast %c2_i32 : i32 to index
    %c0_52 = arith.constant 0 : index
    %124 = vector.load %arg10[%123, %c0_52] : memref<4x128xf32, #tpu.memory_space<vmem>>, vector<1x128xf32>
    tpu.vector_store %arg10[%123, %c0_52], %122 {strides = array<i32>} : memref<4x128xf32, #tpu.memory_space<vmem>>, vector<1x128xf32>,
    %c3_i32 = arith.constant 3 : i32
    %125 = arith.index_cast %c3_i32 : i32 to index
    %c0_53 = arith.constant 0 : index
    %126 = vector.load %arg0[%125, %c0_53] : memref<4x128xf32, #tpu.memory_space<vmem>>, vector<1x128xf32>
    %127 = vector.extract_strided_slice %97 {offsets = [0, 0], sizes = [1, 32], strides = [1, 1]} : vector<1x128xf32> to vector<1x32xf32>
    %128 = arith.mulf %4, %104 : vector<32x128xf32>
    %129 = arith.addf %3, %128 : vector<32x128xf32>
    %cst_54 = arith.constant dense<0.000000e+00> : vector<1x128xf32>
    %130 = tpu.matmul %126, %1, %cst_54 {dimension_numbers = #tpu.dot_dimension_numbers<[1], [0], [0], [1], [0, 0, 1, 1], [], []>} : vector<1x128xf32>, vector<128x128xf32>, vector<1x128xf32> -> vector<1x128xf32>
    %131 = arith.addf %130, %2 : vector<1x128xf32>
    %cst_55 = arith.constant dense<0.000000e+00> : vector<1x128xf32>
    %132 = tpu.matmul %127, %129, %cst_55 {dimension_numbers = #tpu.dot_dimension_numbers<[1], [0], [0], [1], [0, 0, 1, 1], [], []>} : vector<1x32xf32>, vector<32x128xf32>, vector<1x128xf32> -> vector<1x128xf32>
    %133 = arith.addf %131, %132 : vector<1x128xf32>
    %134 = math.tanh %133 : vector<1x128xf32>
    %cst_56 = arith.constant dense<0.000000e+00> : vector<32x128xf32>
    %135 = tpu.matmul %127, %134, %cst_56 {dimension_numbers = #tpu.dot_dimension_numbers<[0], [0], [1], [1], [0, 1, 1, 1], [], []>} : vector<1x32xf32>, vector<1x128xf32>, vector<32x128xf32> -> vector<32x128xf32>
    %cst_57 = arith.constant 1.000000e+00 : f32
    %136 = arith.subf %cst_57, %0 : f32
    %137 = vector.broadcast %136 : f32 to vector<32x128xf32>
    %138 = arith.mulf %137, %104 : vector<32x128xf32>
    %139 = vector.broadcast %0 : f32 to vector<32x128xf32>
    %140 = arith.mulf %139, %135 : vector<32x128xf32>
    %141 = arith.addf %138, %140 : vector<32x128xf32>
    %cst_58 = arith.constant dense<0.000000e+00> : vector<1x128xf32>
    %142 = tpu.matmul %134, %5, %cst_58 {dimension_numbers = #tpu.dot_dimension_numbers<[1], [0], [0], [1], [0, 0, 1, 1], [], []>} : vector<1x128xf32>, vector<128x128xf32>, vector<1x128xf32> -> vector<1x128xf32>
    %143 = arith.addf %142, %6 : vector<1x128xf32>
    %cst_59 = arith.constant -1.000000e+30 : f32
    %144 = vector.broadcast %cst_59 : f32 to vector<1x128xf32>
    %145 = arith.select %9, %143, %144 : vector<1x128xi1>, vector<1x128xf32>
    %cst_60 = arith.constant dense<0xFF800000> : vector<1xf32>
    %146 = vector.multi_reduction <maximumf>, %145, %cst_60 [1] : vector<1x128xf32> to vector<1xf32>
    %147 = vector.shape_cast %146 : vector<1xf32> to vector<1x1xf32>
    %148 = vector.broadcast %147 : vector<1x1xf32> to vector<1x128xf32>
    %149 = arith.subf %145, %148 : vector<1x128xf32>
    %150 = math.exp %149 : vector<1x128xf32>
    %cst_61 = arith.constant 0.000000e+00 : f32
    %151 = vector.broadcast %cst_61 : f32 to vector<1x128xf32>
    %152 = arith.select %9, %150, %151 : vector<1x128xi1>, vector<1x128xf32>
    %cst_62 = arith.constant dense<0.000000e+00> : vector<1xf32>
    %153 = vector.multi_reduction <add>, %152, %cst_62 [1] : vector<1x128xf32> to vector<1xf32>
    %154 = vector.shape_cast %153 : vector<1xf32> to vector<1x1xf32>
    %155 = vector.broadcast %154 : vector<1x1xf32> to vector<1x128xf32>
    %156 = arith.divf %152, %155 : vector<1x128xf32>
    %cst_63 = arith.constant 0.000000e+00 : f32
    %157 = vector.broadcast %cst_63 : f32 to vector<1x128xf32>
    %158 = arith.select %11, %143, %157 : vector<1x128xi1>, vector<1x128xf32>
    %159 = arith.select %9, %156, %158 : vector<1x128xi1>, vector<1x128xf32>
    %160 = arith.index_cast %c3_i32 : i32 to index
    %c0_64 = arith.constant 0 : index
    %161 = vector.load %arg10[%160, %c0_64] : memref<4x128xf32, #tpu.memory_space<vmem>>, vector<1x128xf32>
    tpu.vector_store %arg10[%160, %c0_64], %159 {strides = array<i32>} : memref<4x128xf32, #tpu.memory_space<vmem>>, vector<1x128xf32>,
    %c4_i32_65 = arith.constant 4 : i32
    %c0_66 = arith.constant 0 : index
    %c0_67 = arith.constant 0 : index
    %162 = vector.load %arg11[%c0_66, %c0_67] : memref<1x128xf32, #tpu.memory_space<vmem>>, vector<1x128xf32>
    tpu.vector_store %arg11[%c0_66, %c0_67], %134 {strides = array<i32>} : memref<1x128xf32, #tpu.memory_space<vmem>>, vector<1x128xf32>,
    %c0_68 = arith.constant 0 : index
    %c0_69 = arith.constant 0 : index
    %163 = vector.load %arg12[%c0_68, %c0_69] : memref<32x128xf32, #tpu.memory_space<vmem>>, vector<32x128xf32>
    tpu.vector_store %arg12[%c0_68, %c0_69], %141 {strides = array<i32>} : memref<32x128xf32, #tpu.memory_space<vmem>>, vector<32x128xf32>,
    return
  }
}

</mosaic_0001>

<llo_original>
// kernel: plastic_rollout.1
$region0: #{plastic_rollout.1}
  #allocation0 [shape = 'u32[]', space=smem, size = 0x4, offset = 0x4, fixed_abs, tag = 'smem constant byte address 0x4 - core index']
  #allocation1 [shape = 'u32[144,128]{1,0:T(1,128)}', space=vmem, size = 0x12000, scoped, tag = 'internal scratch']
  #allocation2 [shape = 'f32[1,1]{1,0:T(1,128)S(6)}', space=smem, size = 0x200, scoped, tag = 'scoped memory for plastic_rollout.1']
  %s0 = inlined_call_operand.vmem [shape: f32[4,128], index: 0, kind: input, shape index: {}]
  %s1 = inlined_call_operand.vmem [shape: f32[1,128], index: 1, kind: input, shape index: {}]
  %s2 = inlined_call_operand.vmem [shape: f32[32,128], index: 2, kind: input, shape index: {}]
  %s3 = inlined_call_operand.vmem [shape: f32[128,128], index: 3, kind: input, shape index: {}]
  %s4 = inlined_call_operand.vmem [shape: f32[1,128], index: 4, kind: input, shape index: {}]
  %s5 = inlined_call_operand.vmem [shape: f32[32,128], index: 5, kind: input, shape index: {}]
  %s6 = inlined_call_operand.vmem [shape: f32[32,128], index: 6, kind: input, shape index: {}]
  %s7 = inlined_call_operand.<no memory space> [shape: f32[1,1], index: 7, kind: input, shape index: {}]
  %s8 = inlined_call_operand.vmem [shape: f32[128,128], index: 8, kind: input, shape index: {}]
  %s9 = inlined_call_operand.vmem [shape: f32[1,128], index: 9, kind: input, shape index: {}]
  %s10 = inlined_call_operand.vmem [shape: f32[4,128], index: 10, kind: output, shape index: {0}]
  %s11 = inlined_call_operand.hbm [shape: f32[1,128], index: 11, kind: output, shape index: {1}]
  %s12 = inlined_call_operand.hbm [shape: f32[32,128], index: 12, kind: output, shape index: {2}]
  %13 = xla_tuple %s10, %s11, %s12
  %s14 = sld [smem:[#allocation0]]
  $region66: #{plastic_rollout.1} parent=0
    _
  %s16 = ssub.s32 1, %s14
  %s17 = scalar_select 0, %s16, %s14
  %18 = sst [smem:[#allocation2]] %s7
  $region1: #{plastic_rollout.1} parent=0
    #allocation3 [shape = 'u8[512]{0}', space=vmem, size = 0x400, scoped, tag = 'output window, operand 1, single buffered']
    #allocation4 [shape = 's32[1]{0}', space=sflag, size = 0x4, scoped, tag = 'scoped memory for plastic_rollout.1']
    #allocation5 [shape = 'u8[16384]{0}', space=vmem, size = 0x4000, scoped, tag = 'output window, operand 2, single buffered']
    #allocation6 [shape = 's32[1]{0}', space=sflag, size = 0x4, scoped, tag = 'scoped memory for plastic_rollout.1']
    %19 = vsyncpa [#allocation4], 0
    %20 = vsyncpa [#allocation6], 0
    // Predicated region
    $region2: #{plastic_rollout.1} parent=1 // pred_check
      _
    $region3: #{plastic_rollout.1} parent=1 // pred_check_branch
      %22 = sbr.rel (0) target = $region5
    $region4: #{plastic_rollout.1} parent=1 // pred_region
      _
    $region5: #{plastic_rollout.1} parent=1 // pred_fallthru
      _
    // Predicated region
    $region6: #{plastic_rollout.1} parent=1 // pred_check
      _
    $region7: #{plastic_rollout.1} parent=1 // pred_check_branch
      %24 = sbr.rel (0) target = $region9
    $region8: #{plastic_rollout.1} parent=1 // pred_region
      _
    $region9: #{plastic_rollout.1} parent=1 // pred_fallthru
      _
    // Predicated region
    $region10: #{plastic_rollout.1} parent=1 // pred_check
      _
    $region11: #{plastic_rollout.1} parent=1 // pred_check_branch
      %26 = sbr.rel (0) target = $region13
    $region12: #{plastic_rollout.1} parent=1 // pred_region
      _
    $region13: #{plastic_rollout.1} parent=1 // pred_fallthru
      _
    // Predicated region
    $region14: #{plastic_rollout.1} parent=1 // pred_check
      _
    $region15: #{plastic_rollout.1} parent=1 // pred_check_branch
      %28 = sbr.rel (0) target = $region17
    $region16: #{plastic_rollout.1} parent=1 // pred_region
      _
    $region17: #{plastic_rollout.1} parent=1 // pred_fallthru
      _
    // Predicated region
    $region18: #{plastic_rollout.1} parent=1 // pred_check
      _
    $region19: #{plastic_rollout.1} parent=1 // pred_check_branch
      %30 = sbr.rel (0) target = $region21
    $region20: #{plastic_rollout.1} parent=1 // pred_region
      _
    $region21: #{plastic_rollout.1} parent=1 // pred_fallthru
      _
    // Predicated region
    $region22: #{plastic_rollout.1} parent=1 // pred_check
      _
    $region23: #{plastic_rollout.1} parent=1 // pred_check_branch
      %32 = sbr.rel (0) target = $region25
    $region24: #{plastic_rollout.1} parent=1 // pred_region
      _
    $region25: #{plastic_rollout.1} parent=1 // pred_fallthru
      _
    // Predicated region
    $region26: #{plastic_rollout.1} parent=1 // pred_check
      _
    $region27: #{plastic_rollout.1} parent=1 // pred_check_branch
      %34 = sbr.rel (0) target = $region29
    $region28: #{plastic_rollout.1} parent=1 // pred_region
      _
    $region29: #{plastic_rollout.1} parent=1 // pred_fallthru
      _
    // Predicated region
    $region30: #{plastic_rollout.1} parent=1 // pred_check
      _
    $region31: #{plastic_rollout.1} parent=1 // pred_check_branch
      %36 = sbr.rel (0) target = $region33
    $region32: #{plastic_rollout.1} parent=1 // pred_region
      _
    $region33: #{plastic_rollout.1} parent=1 // pred_fallthru
      _
    // Predicated region
    $region34: #{plastic_rollout.1} parent=1 // pred_check
      _
    $region35: #{plastic_rollout.1} parent=1 // pred_check_branch
      %38 = sbr.rel (0) target = $region37
    $region36: #{plastic_rollout.1} parent=1 // pred_region
      _
    $region37: #{plastic_rollout.1} parent=1 // pred_fallthru
      _
    // Predicated region
    $region38: #{plastic_rollout.1} parent=1 // pred_check
      _
    $region39: #{plastic_rollout.1} parent=1 // pred_check_branch
      %40 = sbr.rel (0) target = $region41
    $region40: #{plastic_rollout.1} parent=1 // pred_region
      _
    $region41: #{plastic_rollout.1} parent=1 // pred_fallthru
      _
    %s41 = sld [smem:[#allocation2]]
    %v42 = vld [vmem:[%s3] sm:$0xff]
    %v43 = vld [vmem:[%s3 + $0x8] sm:$0xff]
    %v44 = vld [vmem:[%s3 + $0x10] sm:$0xff]
    %v45 = vld [vmem:[%s3 + $0x18] sm:$0xff]
    %v46 = vld [vmem:[%s3 + $0x20] sm:$0xff]
    %v47 = vld [vmem:[%s3 + $0x28] sm:$0xff]
    %v48 = vld [vmem:[%s3 + $0x30] sm:$0xff]
    %v49 = vld [vmem:[%s3 + $0x38] sm:$0xff]
    %v50 = vld [vmem:[%s3 + $0x40] sm:$0xff]
    %v51 = vld [vmem:[%s3 + $0x48] sm:$0xff]
    %v52 = vld [vmem:[%s3 + $0x50] sm:$0xff]
    %v53 = vld [vmem:[%s3 + $0x58] sm:$0xff]
    %v54 = vld [vmem:[%s3 + $0x60] sm:$0xff]
    %v55 = vld [vmem:[%s3 + $0x68] sm:$0xff]
    %v56 = vld [vmem:[%s3 + $0x70] sm:$0xff]
    %v57 = vld [vmem:[%s3 + $0x78] sm:$0xff]
    %v58 = vld [vmem:[%s4] sm:$0x1]
    %v59 = vld [vmem:[%s5] sm:$0xff]
    %v60 = vld [vmem:[%s5 + $0x8] sm:$0xff]
    %v61 = vld [vmem:[%s5 + $0x10] sm:$0xff]
    %v62 = vld [vmem:[%s5 + $0x18] sm:$0xff]
    %v63 = vld [vmem:[%s6] sm:$0xff]
    %v64 = vld [vmem:[%s6 + $0x8] sm:$0xff]
    %v65 = vld [vmem:[%s6 + $0x10] sm:$0xff]
    %v66 = vld [vmem:[%s6 + $0x18] sm:$0xff]
    %v67 = vld [vmem:[%s8] sm:$0xff]
    %v68 = vld [vmem:[%s8 + $0x8] sm:$0xff]
    %v69 = vld [vmem:[%s8 + $0x10] sm:$0xff]
    %v70 = vld [vmem:[%s8 + $0x18] sm:$0xff]
    %v71 = vld [vmem:[%s8 + $0x20] sm:$0xff]
    %v72 = vld [vmem:[%s8 + $0x28] sm:$0xff]
    %v73 = vld [vmem:[%s8 + $0x30] sm:$0xff]
    %v74 = vld [vmem:[%s8 + $0x38] sm:$0xff]
    %v75 = vld [vmem:[%s8 + $0x40] sm:$0xff]
    %v76 = vld [vmem:[%s8 + $0x48] sm:$0xff]
    %v77 = vld [vmem:[%s8 + $0x50] sm:$0xff]
    %v78 = vld [vmem:[%s8 + $0x58] sm:$0xff]
    %v79 = vld [vmem:[%s8 + $0x60] sm:$0xff]
    %v80 = vld [vmem:[%s8 + $0x68] sm:$0xff]
    %v81 = vld [vmem:[%s8 + $0x70] sm:$0xff]
    %v82 = vld [vmem:[%s8 + $0x78] sm:$0xff]
    %v83 = vld [vmem:[%s9] sm:$0x1]
    %v84 = vlaneseq
    %v85 = vand.u32 %v84, 127
    %vm86 = vcmp.lt.s32.totalorder %v85, 4
    %vm87 = vcmp.eq.s32.totalorder %v85, 4
    %v88 = vld [vmem:[%s1] sm:$0x1]
    %v89 = vld [vmem:[%s2] sm:$0xff]
    %v90 = vld [vmem:[%s2 + $0x8] sm:$0xff]
    %v91 = vld [vmem:[%s2 + $0x10] sm:$0xff]
    %v92 = vld [vmem:[%s2 + $0x18] sm:$0xff]
    %v93 = vld [vmem:[%s0] sm:$0x1]
    %v94 = vmul.f32 %v63, %v89
    %v95 = vmul.f32 %v64, %v90
    %v96 = vmul.f32 %v65, %v91
    %v97 = vmul.f32 %v66, %v92
    %v98 = vadd.f32 %v59, %v94
    %v99 = vadd.f32 %v60, %v95
    %v100 = vadd.f32 %v61, %v96
    %v101 = vadd.f32 %v62, %v97
    %102 = vmatprep.subr.mxu0 0.0
    %103 = vmatpush1.msra.mxu0 %v42
    %104 = vmatprep.subr.mxu0 0.0
    %105 = vmatpush1.msra.mxu0 %v43
    %106 = vmatprep.subr.mxu0 0.0
    %107 = vmatpush1.msra.mxu0 %v44
    %108 = vmatprep.subr.mxu0 0.0
    %109 = vmatpush1.msra.mxu0 %v45
    %110 = vmatprep.subr.mxu0 0.0
    %111 = vmatpush1.msra.mxu0 %v46
    %112 = vmatprep.subr.mxu0 0.0
    %113 = vmatpush1.msra.mxu0 %v47
    %114 = vmatprep.subr.mxu0 0.0
    %115 = vmatpush1.msra.mxu0 %v48
    %116 = vmatprep.subr.mxu0 0.0
    %117 = vmatpush1.msra.mxu0 %v49
    %118 = vmatprep.subr.mxu0 0.0
    %119 = vmatpush1.msra.mxu0 %v50
    %120 = vmatprep.subr.mxu0 0.0
    %121 = vmatpush1.msra.mxu0 %v51
    %122 = vmatprep.subr.mxu0 0.0
    %123 = vmatpush1.msra.mxu0 %v52
    %124 = vmatprep.subr.mxu0 0.0
    %125 = vmatpush1.msra.mxu0 %v53
    %126 = vmatprep.subr.mxu0 0.0
    %127 = vmatpush1.msra.mxu0 %v54
    %128 = vmatprep.subr.mxu0 0.0
    %129 = vmatpush1.msra.mxu0 %v55
    %130 = vmatprep.subr.mxu0 0.0
    %131 = vmatpush1.msra.mxu0 %v56
    %132 = vmatprep.subr.mxu0 0.0
    %133 = vmatpush1.msra.mxu0 %v57
    %134 = vmatprep.subr.mxu0 0.0
    %135 = vmatpush1.msra.mxu0 0.0
    %136 = vmatprep.subr.mxu0 0.0
    %137 = vmatpush1.msra.mxu0 0.0
    %138 = vmatprep.subr.mxu0 0.0
    %139 = vmatpush1.msra.mxu0 0.0
    %140 = vmatprep.subr.mxu0 0.0
    %141 = vmatpush1.msra.mxu0 0.0
    %142 = vmatprep.subr.mxu0 0.0
    %143 = vmatpush1.msra.mxu0 0.0
    %144 = vmatprep.subr.mxu0 0.0
    %145 = vmatpush1.msra.mxu0 0.0
    %146 = vmatprep.subr.mxu0 0.0
    %147 = vmatpush1.msra.mxu0 0.0
    %148 = vmatprep.subr.mxu0 0.0
    %149 = vmatpush1.msra.mxu0 0.0
    %150 = vmatprep.subr.mxu0 0.0
    %151 = vmatpush1.msra.mxu0 0.0
    %152 = vmatprep.subr.mxu0 0.0
    %153 = vmatpush1.msra.mxu0 0.0
    %154 = vmatprep.subr.mxu0 0.0
    %155 = vmatpush1.msra.mxu0 0.0
    %156 = vmatprep.subr.mxu0 0.0
    %157 = vmatpush1.msra.mxu0 0.0
    %158 = vmatprep.subr.mxu0 0.0
    %159 = vmatpush1.msra.mxu0 0.0
    %160 = vmatprep.subr.mxu0 0.0
    %161 = vmatpush1.msra.mxu0 0.0
    %162 = vmatprep.subr.mxu0 0.0
    %163 = vmatpush1.msra.mxu0 0.0
    %164 = vmatprep.subr.mxu0 0.0
    %165 = vmatpush1.msra.mxu0 0.0
    %166 = vmatprep.mubr.f32.mxu0 0.0
    %167 = vmatmul.mubr.f32.gmra.mrb[0].mxu0 %v93
    %v168 = vpop.f32.mrb[0].mxu0
    %v169 = vadd.f32 %v58, %v168
    %v170 = vpop.f32.mrb[0].mxu0
    %171 = vdwg.mxu0
    %vm172 = vcmask 261120
    %v174 = vsel %vm172, %v88, 0
    %176 = vmatprep.subr.mxu0 0.0
    %177 = vmatpush1.msra.mxu0 %v98
    %178 = vmatprep.subr.mxu0 0.0
    %179 = vmatpush1.msra.mxu0 %v99
    %180 = vmatprep.subr.mxu0 0.0
    %181 = vmatpush1.msra.mxu0 %v100
    %182 = vmatprep.subr.mxu0 0.0
    %183 = vmatpush1.msra.mxu0 %v101
    %184 = vmatprep.subr.mxu0 0.0
    %185 = vmatpush1.msra.mxu0 0.0
    %186 = vmatprep.subr.mxu0 0.0
    %187 = vmatpush1.msra.mxu0 0.0
    %188 = vmatprep.subr.mxu0 0.0
    %189 = vmatpush1.msra.mxu0 0.0
    %190 = vmatprep.subr.mxu0 0.0
    %191 = vmatpush1.msra.mxu0 0.0
    %192 = vmatprep.subr.mxu0 0.0
    %193 = vmatpush1.msra.mxu0 0.0
    %194 = vmatprep.subr.mxu0 0.0
    %195 = vmatpush1.msra.mxu0 0.0
    %196 = vmatprep.subr.mxu0 0.0
    %197 = vmatpush1.msra.mxu0 0.0
    %198 = vmatprep.subr.mxu0 0.0
    %199 = vmatpush1.msra.mxu0 0.0
    %200 = vmatprep.subr.mxu0 0.0
    %201 = vmatpush1.msra.mxu0 0.0
    %202 = vmatprep.subr.mxu0 0.0
    %203 = vmatpush1.msra.mxu0 0.0
    %204 = vmatprep.subr.mxu0 0.0
    %205 = vmatpush1.msra.mxu0 0.0
    %206 = vmatprep.subr.mxu0 0.0
    %207 = vmatpush1.msra.mxu0 0.0
    %208 = vmatprep.subr.mxu0 0.0
    %209 = vmatpush1.msra.mxu0 0.0
    %210 = vmatprep.subr.mxu0 0.0
    %211 = vmatpush1.msra.mxu0 0.0
    %212 = vmatprep.subr.mxu0 0.0
    %213 = vmatpush1.msra.mxu0 0.0
    %214 = vmatprep.subr.mxu0 0.0
    %215 = vmatpush1.msra.mxu0 0.0
    %216 = vmatprep.subr.mxu0 0.0
    %217 = vmatpush1.msra.mxu0 0.0
    %218 = vmatprep.subr.mxu0 0.0
    %219 = vmatpush1.msra.mxu0 0.0
    %220 = vmatprep.subr.mxu0 0.0
    %221 = vmatpush1.msra.mxu0 0.0
    %222 = vmatprep.subr.mxu0 0.0
    %223 = vmatpush1.msra.mxu0 0.0
    %224 = vmatprep.subr.mxu0 0.0
    %225 = vmatpush1.msra.mxu0 0.0
    %226 = vmatprep.subr.mxu0 0.0
    %227 = vmatpush1.msra.mxu0 0.0
    %228 = vmatprep.subr.mxu0 0.0
    %229 = vmatpush1.msra.mxu0 0.0
    %230 = vmatprep.subr.mxu0 0.0
    %231 = vmatpush1.msra.mxu0 0.0
    %232 = vmatprep.subr.mxu0 0.0
    %233 = vmatpush1.msra.mxu0 0.0
    %234 = vmatprep.subr.mxu0 0.0
    %235 = vmatpush1.msra.mxu0 0.0
    %236 = vmatprep.subr.mxu0 0.0
    %237 = vmatpush1.msra.mxu0 0.0
    %238 = vmatprep.subr.mxu0 0.0
    %239 = vmatpush1.msra.mxu0 0.0
    %240 = vmatprep.mubr.f32.mxu0 0.0
    %241 = vmatmul.mubr.f32.gmra.mrb[0].mxu0 %v174
    %v242 = vpop.f32.mrb[0].mxu0
    %v243 = vadd.f32 0.0, %v242
    %v244 = vpop.f32.mrb[0].mxu0
    %245 = vdwg.mxu0
    %v246 = vadd.f32 %v169, %v243
    %v247 = vtanh.pop %v246
    %248 = vxpose.xlu0.b32.start [1/16] %v88, 128
    %249 = vxpose.xlu0.b32.cont [2/16] 0.0, 128
    %250 = vxpose.xlu0.b32.cont [3/16] 0.0, 128
    %251 = vxpose.xlu0.b32.cont [4/16] 0.0, 128
    %252 = vxpose.xlu0.b32.cont [5/16] 0.0, 128
    %253 = vxpose.xlu0.b32.cont [6/16] 0.0, 128
    %254 = vxpose.xlu0.b32.cont [7/16] 0.0, 128
    %255 = vxpose.xlu0.b32.cont [8/16] 0.0, 128
    %256 = vxpose.xlu0.b32.cont [9/16] 0.0, 128
    %257 = vxpose.xlu0.b32.cont [10/16] 0.0, 128
    %258 = vxpose.xlu0.b32.cont [11/16] 0.0, 128
    %259 = vxpose.xlu0.b32.cont [12/16] 0.0, 128
    %260 = vxpose.xlu0.b32.cont [13/16] 0.0, 128
    %261 = vxpose.xlu0.b32.cont [14/16] 0.0, 128
    %262 = vxpose.xlu0.b32.cont [15/16] 0.0, 128
    %263 = vxpose.xlu0.b32.end [16/16] 0.0, 128
    %v264 = vpop.trf.xlu0
    %v265 = vpop.trf.xlu0
    %v266 = vpop.trf.xlu0
    %v267 = vpop.trf.xlu0
    %v268 = vpop.trf.xlu0
    %v269 = vpop.trf.xlu0
    %v270 = vpop.trf.xlu0
    %v271 = vpop.trf.xlu0
    %v272 = vpop.trf.xlu0
    %v273 = vpop.trf.xlu0
    %v274 = vpop.trf.xlu0
    %v275 = vpop.trf.xlu0
    %v276 = vpop.trf.xlu0
    %v277 = vpop.trf.xlu0
    %v278 = vpop.trf.xlu0
    %v279 = vpop.trf.xlu0
    %vm280 = vcmask 7168
    %v282 = vsel %vm280, %v264, 0
    %v285 = vsel %vm280, %v265, 0
    %v288 = vsel %vm280, %v266, 0
    %v291 = vsel %vm280, %v267, 0
    %vm293 = vcmask 1040384
    %v295 = vsel %vm293, %v247, 0
    %297 = vmatprep.subr.mxu0 0.0
    %298 = vmatpush1.msra.mxu0 %v295
    %299 = vmatprep.subr.mxu0 0.0
    %300 = vmatpush1.msra.mxu0 0.0
    %301 = vmatprep.subr.mxu0 0.0
    %302 = vmatpush1.msra.mxu0 0.0
    %303 = vmatprep.subr.mxu0 0.0
    %304 = vmatpush1.msra.mxu0 0.0
    %305 = vmatprep.subr.mxu0 0.0
    %306 = vmatpush1.msra.mxu0 0.0
    %307 = vmatprep.subr.mxu0 0.0
    %308 = vmatpush1.msra.mxu0 0.0
    %309 = vmatprep.subr.mxu0 0.0
    %310 = vmatpush1.msra.mxu0 0.0
    %311 = vmatprep.subr.mxu0 0.0
    %312 = vmatpush1.msra.mxu0 0.0
    %313 = vmatprep.subr.mxu0 0.0
    %314 = vmatpush1.msra.mxu0 0.0
    %315 = vmatprep.subr.mxu0 0.0
    %316 = vmatpush1.msra.mxu0 0.0
    %317 = vmatprep.subr.mxu0 0.0
    %318 = vmatpush1.msra.mxu0 0.0
    %319 = vmatprep.subr.mxu0 0.0
    %320 = vmatpush1.msra.mxu0 0.0
    %321 = vmatprep.subr.mxu0 0.0
    %322 = vmatpush1.msra.mxu0 0.0
    %323 = vmatprep.subr.mxu0 0.0
    %324 = vmatpush1.msra.mxu0 0.0
    %325 = vmatprep.subr.mxu0 0.0
    %326 = vmatpush1.msra.mxu0 0.0
    %327 = vmatprep.subr.mxu0 0.0
    %328 = vmatpush1.msra.mxu0 0.0
    %329 = vmatprep.subr.mxu0 0.0
    %330 = vmatpush1.msra.mxu0 0.0
    %331 = vmatprep.subr.mxu0 0.0
    %332 = vmatpush1.msra.mxu0 0.0
    %333 = vmatprep.subr.mxu0 0.0
    %334 = vmatpush1.msra.mxu0 0.0
    %335 = vmatprep.subr.mxu0 0.0
    %336 = vmatpush1.msra.mxu0 0.0
    %337 = vmatprep.subr.mxu0 0.0
    %338 = vmatpush1.msra.mxu0 0.0
    %339 = vmatprep.subr.mxu0 0.0
    %340 = vmatpush1.msra.mxu0 0.0
    %341 = vmatprep.subr.mxu0 0.0
    %342 = vmatpush1.msra.mxu0 0.0
    %343 = vmatprep.subr.mxu0 0.0
    %344 = vmatpush1.msra.mxu0 0.0
    %345 = vmatprep.subr.mxu0 0.0
    %346 = vmatpush1.msra.mxu0 0.0
    %347 = vmatprep.subr.mxu0 0.0
    %348 = vmatpush1.msra.mxu0 0.0
    %349 = vmatprep.subr.mxu0 0.0
    %350 = vmatpush1.msra.mxu0 0.0
    %351 = vmatprep.subr.mxu0 0.0
    %352 = vmatpush1.msra.mxu0 0.0
    %353 = vmatprep.subr.mxu0 0.0
    %354 = vmatpush1.msra.mxu0 0.0
    %355 = vmatprep.subr.mxu0 0.0
    %356 = vmatpush1.msra.mxu0 0.0
    %357 = vmatprep.subr.mxu0 0.0
    %358 = vmatpush1.msra.mxu0 0.0
    %359 = vmatprep.subr.mxu0 0.0
    %360 = vmatpush1.msra.mxu0 0.0
    %361 = vmatprep.mubr.f32.mxu0 0.0
    %362 = vmatmul.mubr.f32.gmra.mrb[0].mxu0 %v282
    %v363 = vpop.f32.mrb[0].mxu0
    %v364 = vadd.f32 0.0, %v363
    %v365 = vpop.f32.mrb[0].mxu0
    %366 = vmatprep.mubr.f32.mxu0 0.0
    %367 = vmatmul.mubr.f32.gmra.mrb[0].mxu0 %v285
    %v368 = vpop.f32.mrb[0].mxu0
    %v369 = vadd.f32 0.0, %v368
    %v370 = vpop.f32.mrb[0].mxu0
    %371 = vmatprep.mubr.f32.mxu0 0.0
    %372 = vmatmul.mubr.f32.gmra.mrb[0].mxu0 %v288
    %v373 = vpop.f32.mrb[0].mxu0
    %v374 = vadd.f32 0.0, %v373
    %v375 = vpop.f32.mrb[0].mxu0
    %376 = vmatprep.mubr.f32.mxu0 0.0
    %377 = vmatmul.mubr.f32.gmra.mrb[0].mxu0 %v291
    %v378 = vpop.f32.mrb[0].mxu0
    %v379 = vadd.f32 0.0, %v378
    %v380 = vpop.f32.mrb[0].mxu0
    %381 = vdwg.mxu0
    %s382 = ssub.f32 1.0, %s41
    %v383 = vstv %s382
    %v384 = vmul.f32 %v383, %v89
    %v385 = vmul.f32 %v383, %v90
    %v386 = vmul.f32 %v383, %v91
    %v387 = vmul.f32 %v383, %v92
    %v388 = vstv %s41
    %v389 = vmul.f32 %v388, %v364
    %v390 = vmul.f32 %v388, %v369
    %v391 = vmul.f32 %v388, %v374
    %v392 = vmul.f32 %v388, %v379
    %v393 = vadd.f32 %v384, %v389
    %v394 = vadd.f32 %v385, %v390
    %v395 = vadd.f32 %v386, %v391
    %v396 = vadd.f32 %v387, %v392
    %397 = vmatprep.subr.mxu0 0.0
    %398 = vmatpush1.msra.mxu0 %v67
    %399 = vmatprep.subr.mxu0 0.0
    %400 = vmatpush1.msra.mxu0 %v68
    %401 = vmatprep.subr.mxu0 0.0
    %402 = vmatpush1.msra.mxu0 %v69
    %403 = vmatprep.subr.mxu0 0.0
    %404 = vmatpush1.msra.mxu0 %v70
    %405 = vmatprep.subr.mxu0 0.0
    %406 = vmatpush1.msra.mxu0 %v71
    %407 = vmatprep.subr.mxu0 0.0
    %408 = vmatpush1.msra.mxu0 %v72
    %409 = vmatprep.subr.mxu0 0.0
    %410 = vmatpush1.msra.mxu0 %v73
    %411 = vmatprep.subr.mxu0 0.0
    %412 = vmatpush1.msra.mxu0 %v74
    %413 = vmatprep.subr.mxu0 0.0
    %414 = vmatpush1.msra.mxu0 %v75
    %415 = vmatprep.subr.mxu0 0.0
    %416 = vmatpush1.msra.mxu0 %v76
    %417 = vmatprep.subr.mxu0 0.0
    %418 = vmatpush1.msra.mxu0 %v77
    %419 = vmatprep.subr.mxu0 0.0
    %420 = vmatpush1.msra.mxu0 %v78
    %421 = vmatprep.subr.mxu0 0.0
    %422 = vmatpush1.msra.mxu0 %v79
    %423 = vmatprep.subr.mxu0 0.0
    %424 = vmatpush1.msra.mxu0 %v80
    %425 = vmatprep.subr.mxu0 0.0
    %426 = vmatpush1.msra.mxu0 %v81
    %427 = vmatprep.subr.mxu0 0.0
    %428 = vmatpush1.msra.mxu0 %v82
    %429 = vmatprep.subr.mxu0 0.0
    %430 = vmatpush1.msra.mxu0 0.0
    %431 = vmatprep.subr.mxu0 0.0
    %432 = vmatpush1.msra.mxu0 0.0
    %433 = vmatprep.subr.mxu0 0.0
    %434 = vmatpush1.msra.mxu0 0.0
    %435 = vmatprep.subr.mxu0 0.0
    %436 = vmatpush1.msra.mxu0 0.0
    %437 = vmatprep.subr.mxu0 0.0
    %438 = vmatpush1.msra.mxu0 0.0
    %439 = vmatprep.subr.mxu0 0.0
    %440 = vmatpush1.msra.mxu0 0.0
    %441 = vmatprep.subr.mxu0 0.0
    %442 = vmatpush1.msra.mxu0 0.0
    %443 = vmatprep.subr.mxu0 0.0
    %444 = vmatpush1.msra.mxu0 0.0
    %445 = vmatprep.subr.mxu0 0.0
    %446 = vmatpush1.msra.mxu0 0.0
    %447 = vmatprep.subr.mxu0 0.0
    %448 = vmatpush1.msra.mxu0 0.0
    %449 = vmatprep.subr.mxu0 0.0
    %450 = vmatpush1.msra.mxu0 0.0
    %451 = vmatprep.subr.mxu0 0.0
    %452 = vmatpush1.msra.mxu0 0.0
    %453 = vmatprep.subr.mxu0 0.0
    %454 = vmatpush1.msra.mxu0 0.0
    %455 = vmatprep.subr.mxu0 0.0
    %456 = vmatpush1.msra.mxu0 0.0
    %457 = vmatprep.subr.mxu0 0.0
    %458 = vmatpush1.msra.mxu0 0.0
    %459 = vmatprep.subr.mxu0 0.0
    %460 = vmatpush1.msra.mxu0 0.0
    %461 = vmatprep.mubr.f32.mxu0 0.0
    %462 = vmatmul.mubr.f32.gmra.mrb[0].mxu0 %v247
    %v463 = vpop.f32.mrb[0].mxu0
    %v464 = vadd.f32 %v83, %v463
    %v465 = vpop.f32.mrb[0].mxu0
    %466 = vdwg.mxu0
    %v467 = vsel %vm86, %v464, -1e+30
    %v468 = vsel %vm293, %v467, -inf
    %469 = vmax.xlane.f32.xlu0 %v468
    %v470 = vpop.xlane.xlu0 %469
    %v471 = vsub.f32 %v467, %v470
    %v472 = vmul.f32 %v471, 1.442695
    %v473 = vpow.pop %v472
    %v474 = vsel %vm86, %v473, 0.0
    %v475 = vsel %vm293, %v474, 0.0
    %476 = vadd.xlane.f32.xlu0 %v475
    %v477 = vpop.xlane.xlu0 %476
    %v478 = vrcp.pop %v477
    %v479 = vmul.f32 %v474, %v478
    %v480 = vsel %vm87, %v464, 0.0
    %v481 = vsel %vm86, %v479, %v480
    %482 = vst [vmem:[%s10] sm:$0x1] %v481
    %v483 = vld [vmem:[%s0 + $0x1] sm:$0x1]
    %v484 = vmul.f32 %v63, %v393
    %v485 = vmul.f32 %v64, %v394
    %v486 = vmul.f32 %v65, %v395
    %v487 = vmul.f32 %v66, %v396
    %v488 = vadd.f32 %v59, %v484
    %v489 = vadd.f32 %v60, %v485
    %v490 = vadd.f32 %v61, %v486
    %v491 = vadd.f32 %v62, %v487
    %492 = vmatprep.subr.mxu0 0.0
    %493 = vmatpush1.msra.mxu0 %v42
    %494 = vmatprep.subr.mxu0 0.0
    %495 = vmatpush1.msra.mxu0 %v43
    %496 = vmatprep.subr.mxu0 0.0
    %497 = vmatpush1.msra.mxu0 %v44
    %498 = vmatprep.subr.mxu0 0.0
    %499 = vmatpush1.msra.mxu0 %v45
    %500 = vmatprep.subr.mxu0 0.0
    %501 = vmatpush1.msra.mxu0 %v46
    %502 = vmatprep.subr.mxu0 0.0
    %503 = vmatpush1.msra.mxu0 %v47
    %504 = vmatprep.subr.mxu0 0.0
    %505 = vmatpush1.msra.mxu0 %v48
    %506 = vmatprep.subr.mxu0 0.0
    %507 = vmatpush1.msra.mxu0 %v49
    %508 = vmatprep.subr.mxu0 0.0
    %509 = vmatpush1.msra.mxu0 %v50
    %510 = vmatprep.subr.mxu0 0.0
    %511 = vmatpush1.msra.mxu0 %v51
    %512 = vmatprep.subr.mxu0 0.0
    %513 = vmatpush1.msra.mxu0 %v52
    %514 = vmatprep.subr.mxu0 0.0
    %515 = vmatpush1.msra.mxu0 %v53
    %516 = vmatprep.subr.mxu0 0.0
    %517 = vmatpush1.msra.mxu0 %v54
    %518 = vmatprep.subr.mxu0 0.0
    %519 = vmatpush1.msra.mxu0 %v55
    %520 = vmatprep.subr.mxu0 0.0
    %521 = vmatpush1.msra.mxu0 %v56
    %522 = vmatprep.subr.mxu0 0.0
    %523 = vmatpush1.msra.mxu0 %v57
    %524 = vmatprep.subr.mxu0 0.0
    %525 = vmatpush1.msra.mxu0 0.0
    %526 = vmatprep.subr.mxu0 0.0
    %527 = vmatpush1.msra.mxu0 0.0
    %528 = vmatprep.subr.mxu0 0.0
    %529 = vmatpush1.msra.mxu0 0.0
    %530 = vmatprep.subr.mxu0 0.0
    %531 = vmatpush1.msra.mxu0 0.0
    %532 = vmatprep.subr.mxu0 0.0
    %533 = vmatpush1.msra.mxu0 0.0
    %534 = vmatprep.subr.mxu0 0.0
    %535 = vmatpush1.msra.mxu0 0.0
    %536 = vmatprep.subr.mxu0 0.0
    %537 = vmatpush1.msra.mxu0 0.0
    %538 = vmatprep.subr.mxu0 0.0
    %539 = vmatpush1.msra.mxu0 0.0
    %540 = vmatprep.subr.mxu0 0.0
    %541 = vmatpush1.msra.mxu0 0.0
    %542 = vmatprep.subr.mxu0 0.0
    %543 = vmatpush1.msra.mxu0 0.0
    %544 = vmatprep.subr.mxu0 0.0
    %545 = vmatpush1.msra.mxu0 0.0
    %546 = vmatprep.subr.mxu0 0.0
    %547 = vmatpush1.msra.mxu0 0.0
    %548 = vmatprep.subr.mxu0 0.0
    %549 = vmatpush1.msra.mxu0 0.0
    %550 = vmatprep.subr.mxu0 0.0
    %551 = vmatpush1.msra.mxu0 0.0
    %552 = vmatprep.subr.mxu0 0.0
    %553 = vmatpush1.msra.mxu0 0.0
    %554 = vmatprep.subr.mxu0 0.0
    %555 = vmatpush1.msra.mxu0 0.0
    %556 = vmatprep.mubr.f32.mxu0 0.0
    %557 = vmatmul.mubr.f32.gmra.mrb[0].mxu0 %v483
    %v558 = vpop.f32.mrb[0].mxu0
    %v559 = vadd.f32 %v58, %v558
    %v560 = vpop.f32.mrb[0].mxu0
    %561 = vdwg.mxu0
    %v562 = vsel %vm172, %v247, 0
    %564 = vmatprep.subr.mxu0 0.0
    %565 = vmatpush1.msra.mxu0 %v488
    %566 = vmatprep.subr.mxu0 0.0
    %567 = vmatpush1.msra.mxu0 %v489
    %568 = vmatprep.subr.mxu0 0.0
    %569 = vmatpush1.msra.mxu0 %v490
    %570 = vmatprep.subr.mxu0 0.0
    %571 = vmatpush1.msra.mxu0 %v491
    %572 = vmatprep.subr.mxu0 0.0
    %573 = vmatpush1.msra.mxu0 0.0
    %574 = vmatprep.subr.mxu0 0.0
    %575 = vmatpush1.msra.mxu0 0.0
    %576 = vmatprep.subr.mxu0 0.0
    %577 = vmatpush1.msra.mxu0 0.0
    %578 = vmatprep.subr.mxu0 0.0
    %579 = vmatpush1.msra.mxu0 0.0
    %580 = vmatprep.subr.mxu0 0.0
    %581 = vmatpush1.msra.mxu0 0.0
    %582 = vmatprep.subr.mxu0 0.0
    %583 = vmatpush1.msra.mxu0 0.0
    %584 = vmatprep.subr.mxu0 0.0
    %585 = vmatpush1.msra.mxu0 0.0
    %586 = vmatprep.subr.mxu0 0.0
    %587 = vmatpush1.msra.mxu0 0.0
    %588 = vmatprep.subr.mxu0 0.0
    %589 = vmatpush1.msra.mxu0 0.0
    %590 = vmatprep.subr.mxu0 0.0
    %591 = vmatpush1.msra.mxu0 0.0
    %592 = vmatprep.subr.mxu0 0.0
    %593 = vmatpush1.msra.mxu0 0.0
    %594 = vmatprep.subr.mxu0 0.0
    %595 = vmatpush1.msra.mxu0 0.0
    %596 = vmatprep.subr.mxu0 0.0
    %597 = vmatpush1.msra.mxu0 0.0
    %598 = vmatprep.subr.mxu0 0.0
    %599 = vmatpush1.msra.mxu0 0.0
    %600 = vmatprep.subr.mxu0 0.0
    %601 = vmatpush1.msra.mxu0 0.0
    %602 = vmatprep.subr.mxu0 0.0
    %603 = vmatpush1.msra.mxu0 0.0
    %604 = vmatprep.subr.mxu0 0.0
    %605 = vmatpush1.msra.mxu0 0.0
    %606 = vmatprep.subr.mxu0 0.0
    %607 = vmatpush1.msra.mxu0 0.0
    %608 = vmatprep.subr.mxu0 0.0
    %609 = vmatpush1.msra.mxu0 0.0
    %610 = vmatprep.subr.mxu0 0.0
    %611 = vmatpush1.msra.mxu0 0.0
    %612 = vmatprep.subr.mxu0 0.0
    %613 = vmatpush1.msra.mxu0 0.0
    %614 = vmatprep.subr.mxu0 0.0
    %615 = vmatpush1.msra.mxu0 0.0
    %616 = vmatprep.subr.mxu0 0.0
    %617 = vmatpush1.msra.mxu0 0.0
    %618 = vmatprep.subr.mxu0 0.0
    %619 = vmatpush1.msra.mxu0 0.0
    %620 = vmatprep.subr.mxu0 0.0
    %621 = vmatpush1.msra.mxu0 0.0
    %622 = vmatprep.subr.mxu0 0.0
    %623 = vmatpush1.msra.mxu0 0.0
    %624 = vmatprep.subr.mxu0 0.0
    %625 = vmatpush1.msra.mxu0 0.0
    %626 = vmatprep.subr.mxu0 0.0
    %627 = vmatpush1.msra.mxu0 0.0
    %628 = vmatprep.mubr.f32.mxu0 0.0
    %629 = vmatmul.mubr.f32.gmra.mrb[0].mxu0 %v562
    %v630 = vpop.f32.mrb[0].mxu0
    %v631 = vadd.f32 0.0, %v630
    %v632 = vpop.f32.mrb[0].mxu0
    %633 = vdwg.mxu0
    %v634 = vadd.f32 %v559, %v631
    %v635 = vtanh.pop %v634
    %636 = vxpose.xlu0.b32.start [1/16] %v247, 128
    %637 = vxpose.xlu0.b32.cont [2/16] 0.0, 128
    %638 = vxpose.xlu0.b32.cont [3/16] 0.0, 128
    %639 = vxpose.xlu0.b32.cont [4/16] 0.0, 128
    %640 = vxpose.xlu0.b32.cont [5/16] 0.0, 128
    %641 = vxpose.xlu0.b32.cont [6/16] 0.0, 128
    %642 = vxpose.xlu0.b32.cont [7/16] 0.0, 128
    %643 = vxpose.xlu0.b32.cont [8/16] 0.0, 128
    %644 = vxpose.xlu0.b32.cont [9/16] 0.0, 128
    %645 = vxpose.xlu0.b32.cont [10/16] 0.0, 128
    %646 = vxpose.xlu0.b32.cont [11/16] 0.0, 128
    %647 = vxpose.xlu0.b32.cont [12/16] 0.0, 128
    %648 = vxpose.xlu0.b32.cont [13/16] 0.0, 128
    %649 = vxpose.xlu0.b32.cont [14/16] 0.0, 128
    %650 = vxpose.xlu0.b32.cont [15/16] 0.0, 128
    %651 = vxpose.xlu0.b32.end [16/16] 0.0, 128
    %v652 = vpop.trf.xlu0
    %v653 = vpop.trf.xlu0
    %v654 = vpop.trf.xlu0
    %v655 = vpop.trf.xlu0
    %v656 = vpop.trf.xlu0
    %v657 = vpop.trf.xlu0
    %v658 = vpop.trf.xlu0
    %v659 = vpop.trf.xlu0
    %v660 = vpop.trf.xlu0
    %v661 = vpop.trf.xlu0
    %v662 = vpop.trf.xlu0
    %v663 = vpop.trf.xlu0
    %v664 = vpop.trf.xlu0
    %v665 = vpop.trf.xlu0
    %v666 = vpop.trf.xlu0
    %v667 = vpop.trf.xlu0
    %v669 = vsel %vm280, %v652, 0
    %v672 = vsel %vm280, %v653, 0
    %v675 = vsel %vm280, %v654, 0
    %v678 = vsel %vm280, %v655, 0
    %v681 = vsel %vm293, %v635, 0
    %683 = vmatprep.subr.mxu0 0.0
    %684 = vmatpush1.msra.mxu0 %v681
    %685 = vmatprep.subr.mxu0 0.0
    %686 = vmatpush1.msra.mxu0 0.0
    %687 = vmatprep.subr.mxu0 0.0
    %688 = vmatpush1.msra.mxu0 0.0
    %689 = vmatprep.subr.mxu0 0.0
    %690 = vmatpush1.msra.mxu0 0.0
    %691 = vmatprep.subr.mxu0 0.0
    %692 = vmatpush1.msra.mxu0 0.0
    %693 = vmatprep.subr.mxu0 0.0
    %694 = vmatpush1.msra.mxu0 0.0
    %695 = vmatprep.subr.mxu0 0.0
    %696 = vmatpush1.msra.mxu0 0.0
    %697 = vmatprep.subr.mxu0 0.0
    %698 = vmatpush1.msra.mxu0 0.0
    %699 = vmatprep.subr.mxu0 0.0
    %700 = vmatpush1.msra.mxu0 0.0
    %701 = vmatprep.subr.mxu0 0.0
    %702 = vmatpush1.msra.mxu0 0.0
    %703 = vmatprep.subr.mxu0 0.0
    %704 = vmatpush1.msra.mxu0 0.0
    %705 = vmatprep.subr.mxu0 0.0
    %706 = vmatpush1.msra.mxu0 0.0
    %707 = vmatprep.subr.mxu0 0.0
    %708 = vmatpush1.msra.mxu0 0.0
    %709 = vmatprep.subr.mxu0 0.0
    %710 = vmatpush1.msra.mxu0 0.0
    %711 = vmatprep.subr.mxu0 0.0
    %712 = vmatpush1.msra.mxu0 0.0
    %713 = vmatprep.subr.mxu0 0.0
    %714 = vmatpush1.msra.mxu0 0.0
    %715 = vmatprep.subr.mxu0 0.0
    %716 = vmatpush1.msra.mxu0 0.0
    %717 = vmatprep.subr.mxu0 0.0
    %718 = vmatpush1.msra.mxu0 0.0
    %719 = vmatprep.subr.mxu0 0.0
    %720 = vmatpush1.msra.mxu0 0.0
    %721 = vmatprep.subr.mxu0 0.0
    %722 = vmatpush1.msra.mxu0 0.0
    %723 = vmatprep.subr.mxu0 0.0
    %724 = vmatpush1.msra.mxu0 0.0
    %725 = vmatprep.subr.mxu0 0.0
    %726 = vmatpush1.msra.mxu0 0.0
    %727 = vmatprep.subr.mxu0 0.0
    %728 = vmatpush1.msra.mxu0 0.0
    %729 = vmatprep.subr.mxu0 0.0
    %730 = vmatpush1.msra.mxu0 0.0
    %731 = vmatprep.subr.mxu0 0.0
    %732 = vmatpush1.msra.mxu0 0.0
    %733 = vmatprep.subr.mxu0 0.0
    %734 = vmatpush1.msra.mxu0 0.0
    %735 = vmatprep.subr.mxu0 0.0
    %736 = vmatpush1.msra.mxu0 0.0
    %737 = vmatprep.subr.mxu0 0.0
    %738 = vmatpush1.msra.mxu0 0.0
    %739 = vmatprep.subr.mxu0 0.0
    %740 = vmatpush1.msra.mxu0 0.0
    %741 = vmatprep.subr.mxu0 0.0
    %742 = vmatpush1.msra.mxu0 0.0
    %743 = vmatprep.subr.mxu0 0.0
    %744 = vmatpush1.msra.mxu0 0.0
    %745 = vmatprep.subr.mxu0 0.0
    %746 = vmatpush1.msra.mxu0 0.0
    %747 = vmatprep.mubr.f32.mxu0 0.0
    %748 = vmatmul.mubr.f32.gmra.mrb[0].mxu0 %v669
    %v749 = vpop.f32.mrb[0].mxu0
    %v750 = vadd.f32 0.0, %v749
    %v751 = vpop.f32.mrb[0].mxu0
    %752 = vmatprep.mubr.f32.mxu0 0.0
    %753 = vmatmul.mubr.f32.gmra.mrb[0].mxu0 %v672
    %v754 = vpop.f32.mrb[0].mxu0
    %v755 = vadd.f32 0.0, %v754
    %v756 = vpop.f32.mrb[0].mxu0
    %757 = vmatprep.mubr.f32.mxu0 0.0
    %758 = vmatmul.mubr.f32.gmra.mrb[0].mxu0 %v675
    %v759 = vpop.f32.mrb[0].mxu0
    %v760 = vadd.f32 0.0, %v759
    %v761 = vpop.f32.mrb[0].mxu0
    %762 = vmatprep.mubr.f32.mxu0 0.0
    %763 = vmatmul.mubr.f32.gmra.mrb[0].mxu0 %v678
    %v764 = vpop.f32.mrb[0].mxu0
    %v765 = vadd.f32 0.0, %v764
    %v766 = vpop.f32.mrb[0].mxu0
    %767 = vdwg.mxu0
    %v768 = vmul.f32 %v383, %v393
    %v769 = vmul.f32 %v383, %v394
    %v770 = vmul.f32 %v383, %v395
    %v771 = vmul.f32 %v383, %v396
    %v772 = vmul.f32 %v388, %v750
    %v773 = vmul.f32 %v388, %v755
    %v774 = vmul.f32 %v388, %v760
    %v775 = vmul.f32 %v388, %v765
    %v776 = vadd.f32 %v768, %v772
    %v777 = vadd.f32 %v769, %v773
    %v778 = vadd.f32 %v770, %v774
    %v779 = vadd.f32 %v771, %v775
    %780 = vmatprep.subr.mxu0 0.0
    %781 = vmatpush1.msra.mxu0 %v67
    %782 = vmatprep.subr.mxu0 0.0
    %783 = vmatpush1.msra.mxu0 %v68
    %784 = vmatprep.subr.mxu0 0.0
    %785 = vmatpush1.msra.mxu0 %v69
    %786 = vmatprep.subr.mxu0 0.0
    %787 = vmatpush1.msra.mxu0 %v70
    %788 = vmatprep.subr.mxu0 0.0
    %789 = vmatpush1.msra.mxu0 %v71
    %790 = vmatprep.subr.mxu0 0.0
    %791 = vmatpush1.msra.mxu0 %v72
    %792 = vmatprep.subr.mxu0 0.0
    %793 = vmatpush1.msra.mxu0 %v73
    %794 = vmatprep.subr.mxu0 0.0
    %795 = vmatpush1.msra.mxu0 %v74
    %796 = vmatprep.subr.mxu0 0.0
    %797 = vmatpush1.msra.mxu0 %v75
    %798 = vmatprep.subr.mxu0 0.0
    %799 = vmatpush1.msra.mxu0 %v76
    %800 = vmatprep.subr.mxu0 0.0
    %801 = vmatpush1.msra.mxu0 %v77
    %802 = vmatprep.subr.mxu0 0.0
    %803 = vmatpush1.msra.mxu0 %v78
    %804 = vmatprep.subr.mxu0 0.0
    %805 = vmatpush1.msra.mxu0 %v79
    %806 = vmatprep.subr.mxu0 0.0
    %807 = vmatpush1.msra.mxu0 %v80
    %808 = vmatprep.subr.mxu0 0.0
    %809 = vmatpush1.msra.mxu0 %v81
    %810 = vmatprep.subr.mxu0 0.0
    %811 = vmatpush1.msra.mxu0 %v82
    %812 = vmatprep.subr.mxu0 0.0
    %813 = vmatpush1.msra.mxu0 0.0
    %814 = vmatprep.subr.mxu0 0.0
    %815 = vmatpush1.msra.mxu0 0.0
    %816 = vmatprep.subr.mxu0 0.0
    %817 = vmatpush1.msra.mxu0 0.0
    %818 = vmatprep.subr.mxu0 0.0
    %819 = vmatpush1.msra.mxu0 0.0
    %820 = vmatprep.subr.mxu0 0.0
    %821 = vmatpush1.msra.mxu0 0.0
    %822 = vmatprep.subr.mxu0 0.0
    %823 = vmatpush1.msra.mxu0 0.0
    %824 = vmatprep.subr.mxu0 0.0
    %825 = vmatpush1.msra.mxu0 0.0
    %826 = vmatprep.subr.mxu0 0.0
    %827 = vmatpush1.msra.mxu0 0.0
    %828 = vmatprep.subr.mxu0 0.0
    %829 = vmatpush1.msra.mxu0 0.0
    %830 = vmatprep.subr.mxu0 0.0
    %831 = vmatpush1.msra.mxu0 0.0
    %832 = vmatprep.subr.mxu0 0.0
    %833 = vmatpush1.msra.mxu0 0.0
    %834 = vmatprep.subr.mxu0 0.0
    %835 = vmatpush1.msra.mxu0 0.0
    %836 = vmatprep.subr.mxu0 0.0
    %837 = vmatpush1.msra.mxu0 0.0
    %838 = vmatprep.subr.mxu0 0.0
    %839 = vmatpush1.msra.mxu0 0.0
    %840 = vmatprep.subr.mxu0 0.0
    %841 = vmatpush1.msra.mxu0 0.0
    %842 = vmatprep.subr.mxu0 0.0
    %843 = vmatpush1.msra.mxu0 0.0
    %844 = vmatprep.mubr.f32.mxu0 0.0
    %845 = vmatmul.mubr.f32.gmra.mrb[0].mxu0 %v635
    %v846 = vpop.f32.mrb[0].mxu0
    %v847 = vadd.f32 %v83, %v846
    %v848 = vpop.f32.mrb[0].mxu0
    %849 = vdwg.mxu0
    %v850 = vsel %vm86, %v847, -1e+30
    %v851 = vsel %vm293, %v850, -inf
    %852 = vmax.xlane.f32.xlu0 %v851
    %v853 = vpop.xlane.xlu0 %852
    %v854 = vsub.f32 %v850, %v853
    %v855 = vmul.f32 %v854, 1.442695
    %v856 = vpow.pop %v855
    %v857 = vsel %vm86, %v856, 0.0
    %v858 = vsel %vm293, %v857, 0.0
    %859 = vadd.xlane.f32.xlu0 %v858
    %v860 = vpop.xlane.xlu0 %859
    %v861 = vrcp.pop %v860
    %v862 = vmul.f32 %v857, %v861
    %v863 = vsel %vm87, %v847, 0.0
    %v864 = vsel %vm86, %v862, %v863
    %865 = vst [vmem:[%s10 + $0x1] sm:$0x1] %v864
    %v866 = vld [vmem:[%s0 + $0x2] sm:$0x1]
    %v867 = vmul.f32 %v63, %v776
    %v868 = vmul.f32 %v64, %v777
    %v869 = vmul.f32 %v65, %v778
    %v870 = vmul.f32 %v66, %v779
    %v871 = vadd.f32 %v59, %v867
    %v872 = vadd.f32 %v60, %v868
    %v873 = vadd.f32 %v61, %v869
    %v874 = vadd.f32 %v62, %v870
    %875 = vmatprep.subr.mxu0 0.0
    %876 = vmatpush1.msra.mxu0 %v42
    %877 = vmatprep.subr.mxu0 0.0
    %878 = vmatpush1.msra.mxu0 %v43
    %879 = vmatprep.subr.mxu0 0.0
    %880 = vmatpush1.msra.mxu0 %v44
    %881 = vmatprep.subr.mxu0 0.0
    %882 = vmatpush1.msra.mxu0 %v45
    %883 = vmatprep.subr.mxu0 0.0
    %884 = vmatpush1.msra.mxu0 %v46
    %885 = vmatprep.subr.mxu0 0.0
    %886 = vmatpush1.msra.mxu0 %v47
    %887 = vmatprep.subr.mxu0 0.0
    %888 = vmatpush1.msra.mxu0 %v48
    %889 = vmatprep.subr.mxu0 0.0
    %890 = vmatpush1.msra.mxu0 %v49
    %891 = vmatprep.subr.mxu0 0.0
    %892 = vmatpush1.msra.mxu0 %v50
    %893 = vmatprep.subr.mxu0 0.0
    %894 = vmatpush1.msra.mxu0 %v51
    %895 = vmatprep.subr.mxu0 0.0
    %896 = vmatpush1.msra.mxu0 %v52
    %897 = vmatprep.subr.mxu0 0.0
    %898 = vmatpush1.msra.mxu0 %v53
    %899 = vmatprep.subr.mxu0 0.0
    %900 = vmatpush1.msra.mxu0 %v54
    %901 = vmatprep.subr.mxu0 0.0
    %902 = vmatpush1.msra.mxu0 %v55
    %903 = vmatprep.subr.mxu0 0.0
    %904 = vmatpush1.msra.mxu0 %v56
    %905 = vmatprep.subr.mxu0 0.0
    %906 = vmatpush1.msra.mxu0 %v57
    %907 = vmatprep.subr.mxu0 0.0
    %908 = vmatpush1.msra.mxu0 0.0
    %909 = vmatprep.subr.mxu0 0.0
    %910 = vmatpush1.msra.mxu0 0.0
    %911 = vmatprep.subr.mxu0 0.0
    %912 = vmatpush1.msra.mxu0 0.0
    %913 = vmatprep.subr.mxu0 0.0
    %914 = vmatpush1.msra.mxu0 0.0
    %915 = vmatprep.subr.mxu0 0.0
    %916 = vmatpush1.msra.mxu0 0.0
    %917 = vmatprep.subr.mxu0 0.0
    %918 = vmatpush1.msra.mxu0 0.0
    %919 = vmatprep.subr.mxu0 0.0
    %920 = vmatpush1.msra.mxu0 0.0
    %921 = vmatprep.subr.mxu0 0.0
    %922 = vmatpush1.msra.mxu0 0.0
    %923 = vmatprep.subr.mxu0 0.0
    %924 = vmatpush1.msra.mxu0 0.0
    %925 = vmatprep.subr.mxu0 0.0
    %926 = vmatpush1.msra.mxu0 0.0
    %927 = vmatprep.subr.mxu0 0.0
    %928 = vmatpush1.msra.mxu0 0.0
    %929 = vmatprep.subr.mxu0 0.0
    %930 = vmatpush1.msra.mxu0 0.0
    %931 = vmatprep.subr.mxu0 0.0
    %932 = vmatpush1.msra.mxu0 0.0
    %933 = vmatprep.subr.mxu0 0.0
    %934 = vmatpush1.msra.mxu0 0.0
    %935 = vmatprep.subr.mxu0 0.0
    %936 = vmatpush1.msra.mxu0 0.0
    %937 = vmatprep.subr.mxu0 0.0
    %938 = vmatpush1.msra.mxu0 0.0
    %939 = vmatprep.mubr.f32.mxu0 0.0
    %940 = vmatmul.mubr.f32.gmra.mrb[0].mxu0 %v866
    %v941 = vpop.f32.mrb[0].mxu0
    %v942 = vadd.f32 %v58, %v941
    %v943 = vpop.f32.mrb[0].mxu0
    %944 = vdwg.mxu0
    %v945 = vsel %vm172, %v635, 0
    %947 = vmatprep.subr.mxu0 0.0
    %948 = vmatpush1.msra.mxu0 %v871
    %949 = vmatprep.subr.mxu0 0.0
    %950 = vmatpush1.msra.mxu0 %v872
    %951 = vmatprep.subr.mxu0 0.0
    %952 = vmatpush1.msra.mxu0 %v873
    %953 = vmatprep.subr.mxu0 0.0
    %954 = vmatpush1.msra.mxu0 %v874
    %955 = vmatprep.subr.mxu0 0.0
    %956 = vmatpush1.msra.mxu0 0.0
    %957 = vmatprep.subr.mxu0 0.0
    %958 = vmatpush1.msra.mxu0 0.0
    %959 = vmatprep.subr.mxu0 0.0
    %960 = vmatpush1.msra.mxu0 0.0
    %961 = vmatprep.subr.mxu0 0.0
    %962 = vmatpush1.msra.mxu0 0.0
    %963 = vmatprep.subr.mxu0 0.0
    %964 = vmatpush1.msra.mxu0 0.0
    %965 = vmatprep.subr.mxu0 0.0
    %966 = vmatpush1.msra.mxu0 0.0
    %967 = vmatprep.subr.mxu0 0.0
    %968 = vmatpush1.msra.mxu0 0.0
    %969 = vmatprep.subr.mxu0 0.0
    %970 = vmatpush1.msra.mxu0 0.0
    %971 = vmatprep.subr.mxu0 0.0
    %972 = vmatpush1.msra.mxu0 0.0
    %973 = vmatprep.subr.mxu0 0.0
    %974 = vmatpush1.msra.mxu0 0.0
    %975 = vmatprep.subr.mxu0 0.0
    %976 = vmatpush1.msra.mxu0 0.0
    %977 = vmatprep.subr.mxu0 0.0
    %978 = vmatpush1.msra.mxu0 0.0
    %979 = vmatprep.subr.mxu0 0.0
    %980 = vmatpush1.msra.mxu0 0.0
    %981 = vmatprep.subr.mxu0 0.0
    %982 = vmatpush1.msra.mxu0 0.0
    %983 = vmatprep.subr.mxu0 0.0
    %984 = vmatpush1.msra.mxu0 0.0
    %985 = vmatprep.subr.mxu0 0.0
    %986 = vmatpush1.msra.mxu0 0.0
    %987 = vmatprep.subr.mxu0 0.0
    %988 = vmatpush1.msra.mxu0 0.0
    %989 = vmatprep.subr.mxu0 0.0
    %990 = vmatpush1.msra.mxu0 0.0
    %991 = vmatprep.subr.mxu0 0.0
    %992 = vmatpush1.msra.mxu0 0.0
    %993 = vmatprep.subr.mxu0 0.0
    %994 = vmatpush1.msra.mxu0 0.0
    %995 = vmatprep.subr.mxu0 0.0
    %996 = vmatpush1.msra.mxu0 0.0
    %997 = vmatprep.subr.mxu0 0.0
    %998 = vmatpush1.msra.mxu0 0.0
    %999 = vmatprep.subr.mxu0 0.0
    %1000 = vmatpush1.msra.mxu0 0.0
    %1001 = vmatprep.subr.mxu0 0.0
    %1002 = vmatpush1.msra.mxu0 0.0
    %1003 = vmatprep.subr.mxu0 0.0
    %1004 = vmatpush1.msra.mxu0 0.0
    %1005 = vmatprep.subr.mxu0 0.0
    %1006 = vmatpush1.msra.mxu0 0.0
    %1007 = vmatprep.subr.mxu0 0.0
    %1008 = vmatpush1.msra.mxu0 0.0
    %1009 = vmatprep.subr.mxu0 0.0
    %1010 = vmatpush1.msra.mxu0 0.0
    %1011 = vmatprep.mubr.f32.mxu0 0.0
    %1012 = vmatmul.mubr.f32.gmra.mrb[0].mxu0 %v945
    %v1013 = vpop.f32.mrb[0].mxu0
    %v1014 = vadd.f32 0.0, %v1013
    %v1015 = vpop.f32.mrb[0].mxu0
    %1016 = vdwg.mxu0
    %v1017 = vadd.f32 %v942, %v1014
    %v1018 = vtanh.pop %v1017
    %1019 = vxpose.xlu0.b32.start [1/16] %v635, 128
    %1020 = vxpose.xlu0.b32.cont [2/16] 0.0, 128
    %1021 = vxpose.xlu0.b32.cont [3/16] 0.0, 128
    %1022 = vxpose.xlu0.b32.cont [4/16] 0.0, 128
    %1023 = vxpose.xlu0.b32.cont [5/16] 0.0, 128
    %1024 = vxpose.xlu0.b32.cont [6/16] 0.0, 128
    %1025 = vxpose.xlu0.b32.cont [7/16] 0.0, 128
    %1026 = vxpose.xlu0.b32.cont [8/16] 0.0, 128
    %1027 = vxpose.xlu0.b32.cont [9/16] 0.0, 128
    %1028 = vxpose.xlu0.b32.cont [10/16] 0.0, 128
    %1029 = vxpose.xlu0.b32.cont [11/16] 0.0, 128
    %1030 = vxpose.xlu0.b32.cont [12/16] 0.0, 128
    %1031 = vxpose.xlu0.b32.cont [13/16] 0.0, 128
    %1032 = vxpose.xlu0.b32.cont [14/16] 0.0, 128
    %1033 = vxpose.xlu0.b32.cont [15/16] 0.0, 128
    %1034 = vxpose.xlu0.b32.end [16/16] 0.0, 128
    %v1035 = vpop.trf.xlu0
    %v1036 = vpop.trf.xlu0
    %v1037 = vpop.trf.xlu0
    %v1038 = vpop.trf.xlu0
    %v1039 = vpop.trf.xlu0
    %v1040 = vpop.trf.xlu0
    %v1041 = vpop.trf.xlu0
    %v1042 = vpop.trf.xlu0
    %v1043 = vpop.trf.xlu0
    %v1044 = vpop.trf.xlu0
    %v1045 = vpop.trf.xlu0
    %v1046 = vpop.trf.xlu0
    %v1047 = vpop.trf.xlu0
    %v1048 = vpop.trf.xlu0
    %v1049 = vpop.trf.xlu0
    %v1050 = vpop.trf.xlu0
    %v1052 = vsel %vm280, %v1035, 0
    %v1055 = vsel %vm280, %v1036, 0
    %v1058 = vsel %vm280, %v1037, 0
    %v1061 = vsel %vm280, %v1038, 0
    %v1064 = vsel %vm293, %v1018, 0
    %1066 = vmatprep.subr.mxu0 0.0
    %1067 = vmatpush1.msra.mxu0 %v1064
    %1068 = vmatprep.subr.mxu0 0.0
    %1069 = vmatpush1.msra.mxu0 0.0
    %1070 = vmatprep.subr.mxu0 0.0
    %1071 = vmatpush1.msra.mxu0 0.0
    %1072 = vmatprep.subr.mxu0 0.0
    %1073 = vmatpush1.msra.mxu0 0.0
    %1074 = vmatprep.subr.mxu0 0.0
    %1075 = vmatpush1.msra.mxu0 0.0
    %1076 = vmatprep.subr.mxu0 0.0
    %1077 = vmatpush1.msra.mxu0 0.0
    %1078 = vmatprep.subr.mxu0 0.0
    %1079 = vmatpush1.msra.mxu0 0.0
    %1080 = vmatprep.subr.mxu0 0.0
    %1081 = vmatpush1.msra.mxu0 0.0
    %1082 = vmatprep.subr.mxu0 0.0
    %1083 = vmatpush1.msra.mxu0 0.0
    %1084 = vmatprep.subr.mxu0 0.0
    %1085 = vmatpush1.msra.mxu0 0.0
    %1086 = vmatprep.subr.mxu0 0.0
    %1087 = vmatpush1.msra.mxu0 0.0
    %1088 = vmatprep.subr.mxu0 0.0
    %1089 = vmatpush1.msra.mxu0 0.0
    %1090 = vmatprep.subr.mxu0 0.0
    %1091 = vmatpush1.msra.mxu0 0.0
    %1092 = vmatprep.subr.mxu0 0.0
    %1093 = vmatpush1.msra.mxu0 0.0
    %1094 = vmatprep.subr.mxu0 0.0
    %1095 = vmatpush1.msra.mxu0 0.0
    %1096 = vmatprep.subr.mxu0 0.0
    %1097 = vmatpush1.msra.mxu0 0.0
    %1098 = vmatprep.subr.mxu0 0.0
    %1099 = vmatpush1.msra.mxu0 0.0
    %1100 = vmatprep.subr.mxu0 0.0
    %1101 = vmatpush1.msra.mxu0 0.0
    %1102 = vmatprep.subr.mxu0 0.0
    %1103 = vmatpush1.msra.mxu0 0.0
    %1104 = vmatprep.subr.mxu0 0.0
    %1105 = vmatpush1.msra.mxu0 0.0
    %1106 = vmatprep.subr.mxu0 0.0
    %1107 = vmatpush1.msra.mxu0 0.0
    %1108 = vmatprep.subr.mxu0 0.0
    %1109 = vmatpush1.msra.mxu0 0.0
    %1110 = vmatprep.subr.mxu0 0.0
    %1111 = vmatpush1.msra.mxu0 0.0
    %1112 = vmatprep.subr.mxu0 0.0
    %1113 = vmatpush1.msra.mxu0 0.0
    %1114 = vmatprep.subr.mxu0 0.0
    %1115 = vmatpush1.msra.mxu0 0.0
    %1116 = vmatprep.subr.mxu0 0.0
    %1117 = vmatpush1.msra.mxu0 0.0
    %1118 = vmatprep.subr.mxu0 0.0
    %1119 = vmatpush1.msra.mxu0 0.0
    %1120 = vmatprep.subr.mxu0 0.0
    %1121 = vmatpush1.msra.mxu0 0.0
    %1122 = vmatprep.subr.mxu0 0.0
    %1123 = vmatpush1.msra.mxu0 0.0
    %1124 = vmatprep.subr.mxu0 0.0
    %1125 = vmatpush1.msra.mxu0 0.0
    %1126 = vmatprep.subr.mxu0 0.0
    %1127 = vmatpush1.msra.mxu0 0.0
    %1128 = vmatprep.subr.mxu0 0.0
    %1129 = vmatpush1.msra.mxu0 0.0
    %1130 = vmatprep.mubr.f32.mxu0 0.0
    %1131 = vmatmul.mubr.f32.gmra.mrb[0].mxu0 %v1052
    %v1132 = vpop.f32.mrb[0].mxu0
    %v1133 = vadd.f32 0.0, %v1132
    %v1134 = vpop.f32.mrb[0].mxu0
    %1135 = vmatprep.mubr.f32.mxu0 0.0
    %1136 = vmatmul.mubr.f32.gmra.mrb[0].mxu0 %v1055
    %v1137 = vpop.f32.mrb[0].mxu0
    %v1138 = vadd.f32 0.0, %v1137
    %v1139 = vpop.f32.mrb[0].mxu0
    %1140 = vmatprep.mubr.f32.mxu0 0.0
    %1141 = vmatmul.mubr.f32.gmra.mrb[0].mxu0 %v1058
    %v1142 = vpop.f32.mrb[0].mxu0
    %v1143 = vadd.f32 0.0, %v1142
    %v1144 = vpop.f32.mrb[0].mxu0
    %1145 = vmatprep.mubr.f32.mxu0 0.0
    %1146 = vmatmul.mubr.f32.gmra.mrb[0].mxu0 %v1061
    %v1147 = vpop.f32.mrb[0].mxu0
    %v1148 = vadd.f32 0.0, %v1147
    %v1149 = vpop.f32.mrb[0].mxu0
    %1150 = vdwg.mxu0
    %v1151 = vmul.f32 %v383, %v776
    %v1152 = vmul.f32 %v383, %v777
    %v1153 = vmul.f32 %v383, %v778
    %v1154 = vmul.f32 %v383, %v779
    %v1155 = vmul.f32 %v388, %v1133
    %v1156 = vmul.f32 %v388, %v1138
    %v1157 = vmul.f32 %v388, %v1143
    %v1158 = vmul.f32 %v388, %v1148
    %v1159 = vadd.f32 %v1151, %v1155
    %v1160 = vadd.f32 %v1152, %v1156
    %v1161 = vadd.f32 %v1153, %v1157
    %v1162 = vadd.f32 %v1154, %v1158
    %1163 = vmatprep.subr.mxu0 0.0
    %1164 = vmatpush1.msra.mxu0 %v67
    %1165 = vmatprep.subr.mxu0 0.0
    %1166 = vmatpush1.msra.mxu0 %v68
    %1167 = vmatprep.subr.mxu0 0.0
    %1168 = vmatpush1.msra.mxu0 %v69
    %1169 = vmatprep.subr.mxu0 0.0
    %1170 = vmatpush1.msra.mxu0 %v70
    %1171 = vmatprep.subr.mxu0 0.0
    %1172 = vmatpush1.msra.mxu0 %v71
    %1173 = vmatprep.subr.mxu0 0.0
    %1174 = vmatpush1.msra.mxu0 %v72
    %1175 = vmatprep.subr.mxu0 0.0
    %1176 = vmatpush1.msra.mxu0 %v73
    %1177 = vmatprep.subr.mxu0 0.0
    %1178 = vmatpush1.msra.mxu0 %v74
    %1179 = vmatprep.subr.mxu0 0.0
    %1180 = vmatpush1.msra.mxu0 %v75
    %1181 = vmatprep.subr.mxu0 0.0
    %1182 = vmatpush1.msra.mxu0 %v76
    %1183 = vmatprep.subr.mxu0 0.0
    %1184 = vmatpush1.msra.mxu0 %v77
    %1185 = vmatprep.subr.mxu0 0.0
    %1186 = vmatpush1.msra.mxu0 %v78
    %1187 = vmatprep.subr.mxu0 0.0
    %1188 = vmatpush1.msra.mxu0 %v79
    %1189 = vmatprep.subr.mxu0 0.0
    %1190 = vmatpush1.msra.mxu0 %v80
    %1191 = vmatprep.subr.mxu0 0.0
    %1192 = vmatpush1.msra.mxu0 %v81
    %1193 = vmatprep.subr.mxu0 0.0
    %1194 = vmatpush1.msra.mxu0 %v82
    %1195 = vmatprep.subr.mxu0 0.0
    %1196 = vmatpush1.msra.mxu0 0.0
    %1197 = vmatprep.subr.mxu0 0.0
    %1198 = vmatpush1.msra.mxu0 0.0
    %1199 = vmatprep.subr.mxu0 0.0
    %1200 = vmatpush1.msra.mxu0 0.0
    %1201 = vmatprep.subr.mxu0 0.0
    %1202 = vmatpush1.msra.mxu0 0.0
    %1203 = vmatprep.subr.mxu0 0.0
    %1204 = vmatpush1.msra.mxu0 0.0
    %1205 = vmatprep.subr.mxu0 0.0
    %1206 = vmatpush1.msra.mxu0 0.0
    %1207 = vmatprep.subr.mxu0 0.0
    %1208 = vmatpush1.msra.mxu0 0.0
    %1209 = vmatprep.subr.mxu0 0.0
    %1210 = vmatpush1.msra.mxu0 0.0
    %1211 = vmatprep.subr.mxu0 0.0
    %1212 = vmatpush1.msra.mxu0 0.0
    %1213 = vmatprep.subr.mxu0 0.0
    %1214 = vmatpush1.msra.mxu0 0.0
    %1215 = vmatprep.subr.mxu0 0.0
    %1216 = vmatpush1.msra.mxu0 0.0
    %1217 = vmatprep.subr.mxu0 0.0
    %1218 = vmatpush1.msra.mxu0 0.0
    %1219 = vmatprep.subr.mxu0 0.0
    %1220 = vmatpush1.msra.mxu0 0.0
    %1221 = vmatprep.subr.mxu0 0.0
    %1222 = vmatpush1.msra.mxu0 0.0
    %1223 = vmatprep.subr.mxu0 0.0
    %1224 = vmatpush1.msra.mxu0 0.0
    %1225 = vmatprep.subr.mxu0 0.0
    %1226 = vmatpush1.msra.mxu0 0.0
    %1227 = vmatprep.mubr.f32.mxu0 0.0
    %1228 = vmatmul.mubr.f32.gmra.mrb[0].mxu0 %v1018
    %v1229 = vpop.f32.mrb[0].mxu0
    %v1230 = vadd.f32 %v83, %v1229
    %v1231 = vpop.f32.mrb[0].mxu0
    %1232 = vdwg.mxu0
    %v1233 = vsel %vm86, %v1230, -1e+30
    %v1234 = vsel %vm293, %v1233, -inf
    %1235 = vmax.xlane.f32.xlu0 %v1234
    %v1236 = vpop.xlane.xlu0 %1235
    %v1237 = vsub.f32 %v1233, %v1236
    %v1238 = vmul.f32 %v1237, 1.442695
    %v1239 = vpow.pop %v1238
    %v1240 = vsel %vm86, %v1239, 0.0
    %v1241 = vsel %vm293, %v1240, 0.0
    %1242 = vadd.xlane.f32.xlu0 %v1241
    %v1243 = vpop.xlane.xlu0 %1242
    %v1244 = vrcp.pop %v1243
    %v1245 = vmul.f32 %v1240, %v1244
    %v1246 = vsel %vm87, %v1230, 0.0
    %v1247 = vsel %vm86, %v1245, %v1246
    %1248 = vst [vmem:[%s10 + $0x2] sm:$0x1] %v1247
    %v1249 = vld [vmem:[%s0 + $0x3] sm:$0x1]
    %v1250 = vmul.f32 %v63, %v1159
    %v1251 = vmul.f32 %v64, %v1160
    %v1252 = vmul.f32 %v65, %v1161
    %v1253 = vmul.f32 %v66, %v1162
    %v1254 = vadd.f32 %v59, %v1250
    %v1255 = vadd.f32 %v60, %v1251
    %v1256 = vadd.f32 %v61, %v1252
    %v1257 = vadd.f32 %v62, %v1253
    %1258 = vmatprep.subr.mxu0 0.0
    %1259 = vmatpush1.msra.mxu0 %v42
    %1260 = vmatprep.subr.mxu0 0.0
    %1261 = vmatpush1.msra.mxu0 %v43
    %1262 = vmatprep.subr.mxu0 0.0
    %1263 = vmatpush1.msra.mxu0 %v44
    %1264 = vmatprep.subr.mxu0 0.0
    %1265 = vmatpush1.msra.mxu0 %v45
    %1266 = vmatprep.subr.mxu0 0.0
    %1267 = vmatpush1.msra.mxu0 %v46
    %1268 = vmatprep.subr.mxu0 0.0
    %1269 = vmatpush1.msra.mxu0 %v47
    %1270 = vmatprep.subr.mxu0 0.0
    %1271 = vmatpush1.msra.mxu0 %v48
    %1272 = vmatprep.subr.mxu0 0.0
    %1273 = vmatpush1.msra.mxu0 %v49
    %1274 = vmatprep.subr.mxu0 0.0
    %1275 = vmatpush1.msra.mxu0 %v50
    %1276 = vmatprep.subr.mxu0 0.0
    %1277 = vmatpush1.msra.mxu0 %v51
    %1278 = vmatprep.subr.mxu0 0.0
    %1279 = vmatpush1.msra.mxu0 %v52
    %1280 = vmatprep.subr.mxu0 0.0
    %1281 = vmatpush1.msra.mxu0 %v53
    %1282 = vmatprep.subr.mxu0 0.0
    %1283 = vmatpush1.msra.mxu0 %v54
    %1284 = vmatprep.subr.mxu0 0.0
    %1285 = vmatpush1.msra.mxu0 %v55
    %1286 = vmatprep.subr.mxu0 0.0
    %1287 = vmatpush1.msra.mxu0 %v56
    %1288 = vmatprep.subr.mxu0 0.0
    %1289 = vmatpush1.msra.mxu0 %v57
    %1290 = vmatprep.subr.mxu0 0.0
    %1291 = vmatpush1.msra.mxu0 0.0
    %1292 = vmatprep.subr.mxu0 0.0
    %1293 = vmatpush1.msra.mxu0 0.0
    %1294 = vmatprep.subr.mxu0 0.0
    %1295 = vmatpush1.msra.mxu0 0.0
    %1296 = vmatprep.subr.mxu0 0.0
    %1297 = vmatpush1.msra.mxu0 0.0
    %1298 = vmatprep.subr.mxu0 0.0
    %1299 = vmatpush1.msra.mxu0 0.0
    %1300 = vmatprep.subr.mxu0 0.0
    %1301 = vmatpush1.msra.mxu0 0.0
    %1302 = vmatprep.subr.mxu0 0.0
    %1303 = vmatpush1.msra.mxu0 0.0
    %1304 = vmatprep.subr.mxu0 0.0
    %1305 = vmatpush1.msra.mxu0 0.0
    %1306 = vmatprep.subr.mxu0 0.0
    %1307 = vmatpush1.msra.mxu0 0.0
    %1308 = vmatprep.subr.mxu0 0.0
    %1309 = vmatpush1.msra.mxu0 0.0
    %1310 = vmatprep.subr.mxu0 0.0
    %1311 = vmatpush1.msra.mxu0 0.0
    %1312 = vmatprep.subr.mxu0 0.0
    %1313 = vmatpush1.msra.mxu0 0.0
    %1314 = vmatprep.subr.mxu0 0.0
    %1315 = vmatpush1.msra.mxu0 0.0
    %1316 = vmatprep.subr.mxu0 0.0
    %1317 = vmatpush1.msra.mxu0 0.0
    %1318 = vmatprep.subr.mxu0 0.0
    %1319 = vmatpush1.msra.mxu0 0.0
    %1320 = vmatprep.subr.mxu0 0.0
    %1321 = vmatpush1.msra.mxu0 0.0
    %1322 = vmatprep.mubr.f32.mxu0 0.0
    %1323 = vmatmul.mubr.f32.gmra.mrb[0].mxu0 %v1249
    %v1324 = vpop.f32.mrb[0].mxu0
    %v1325 = vadd.f32 %v58, %v1324
    %v1326 = vpop.f32.mrb[0].mxu0
    %1327 = vdwg.mxu0
    %v1328 = vsel %vm172, %v1018, 0
    %1330 = vmatprep.subr.mxu0 0.0
    %1331 = vmatpush1.msra.mxu0 %v1254
    %1332 = vmatprep.subr.mxu0 0.0
    %1333 = vmatpush1.msra.mxu0 %v1255
    %1334 = vmatprep.subr.mxu0 0.0
    %1335 = vmatpush1.msra.mxu0 %v1256
    %1336 = vmatprep.subr.mxu0 0.0
    %1337 = vmatpush1.msra.mxu0 %v1257
    %1338 = vmatprep.subr.mxu0 0.0
    %1339 = vmatpush1.msra.mxu0 0.0
    %1340 = vmatprep.subr.mxu0 0.0
    %1341 = vmatpush1.msra.mxu0 0.0
    %1342 = vmatprep.subr.mxu0 0.0
    %1343 = vmatpush1.msra.mxu0 0.0
    %1344 = vmatprep.subr.mxu0 0.0
    %1345 = vmatpush1.msra.mxu0 0.0
    %1346 = vmatprep.subr.mxu0 0.0
    %1347 = vmatpush1.msra.mxu0 0.0
    %1348 = vmatprep.subr.mxu0 0.0
    %1349 = vmatpush1.msra.mxu0 0.0
    %1350 = vmatprep.subr.mxu0 0.0
    %1351 = vmatpush1.msra.mxu0 0.0
    %1352 = vmatprep.subr.mxu0 0.0
    %1353 = vmatpush1.msra.mxu0 0.0
    %1354 = vmatprep.subr.mxu0 0.0
    %1355 = vmatpush1.msra.mxu0 0.0
    %1356 = vmatprep.subr.mxu0 0.0
    %1357 = vmatpush1.msra.mxu0 0.0
    %1358 = vmatprep.subr.mxu0 0.0
    %1359 = vmatpush1.msra.mxu0 0.0
    %1360 = vmatprep.subr.mxu0 0.0
    %1361 = vmatpush1.msra.mxu0 0.0
    %1362 = vmatprep.subr.mxu0 0.0
    %1363 = vmatpush1.msra.mxu0 0.0
    %1364 = vmatprep.subr.mxu0 0.0
    %1365 = vmatpush1.msra.mxu0 0.0
    %1366 = vmatprep.subr.mxu0 0.0
    %1367 = vmatpush1.msra.mxu0 0.0
    %1368 = vmatprep.subr.mxu0 0.0
    %1369 = vmatpush1.msra.mxu0 0.0
    %1370 = vmatprep.subr.mxu0 0.0
    %1371 = vmatpush1.msra.mxu0 0.0
    %1372 = vmatprep.subr.mxu0 0.0
    %1373 = vmatpush1.msra.mxu0 0.0
    %1374 = vmatprep.subr.mxu0 0.0
    %1375 = vmatpush1.msra.mxu0 0.0
    %1376 = vmatprep.subr.mxu0 0.0
    %1377 = vmatpush1.msra.mxu0 0.0
    %1378 = vmatprep.subr.mxu0 0.0
    %1379 = vmatpush1.msra.mxu0 0.0
    %1380 = vmatprep.subr.mxu0 0.0
    %1381 = vmatpush1.msra.mxu0 0.0
    %1382 = vmatprep.subr.mxu0 0.0
    %1383 = vmatpush1.msra.mxu0 0.0
    %1384 = vmatprep.subr.mxu0 0.0
    %1385 = vmatpush1.msra.mxu0 0.0
    %1386 = vmatprep.subr.mxu0 0.0
    %1387 = vmatpush1.msra.mxu0 0.0
    %1388 = vmatprep.subr.mxu0 0.0
    %1389 = vmatpush1.msra.mxu0 0.0
    %1390 = vmatprep.subr.mxu0 0.0
    %1391 = vmatpush1.msra.mxu0 0.0
    %1392 = vmatprep.subr.mxu0 0.0
    %1393 = vmatpush1.msra.mxu0 0.0
    %1394 = vmatprep.mubr.f32.mxu0 0.0
    %1395 = vmatmul.mubr.f32.gmra.mrb[0].mxu0 %v1328
    %v1396 = vpop.f32.mrb[0].mxu0
    %v1397 = vadd.f32 0.0, %v1396
    %v1398 = vpop.f32.mrb[0].mxu0
    %1399 = vdwg.mxu0
    %v1400 = vadd.f32 %v1325, %v1397
    %v1401 = vtanh.pop %v1400
    %1402 = vxpose.xlu0.b32.start [1/16] %v1018, 128
    %1403 = vxpose.xlu0.b32.cont [2/16] 0.0, 128
    %1404 = vxpose.xlu0.b32.cont [3/16] 0.0, 128
    %1405 = vxpose.xlu0.b32.cont [4/16] 0.0, 128
    %1406 = vxpose.xlu0.b32.cont [5/16] 0.0, 128
    %1407 = vxpose.xlu0.b32.cont [6/16] 0.0, 128
    %1408 = vxpose.xlu0.b32.cont [7/16] 0.0, 128
    %1409 = vxpose.xlu0.b32.cont [8/16] 0.0, 128
    %1410 = vxpose.xlu0.b32.cont [9/16] 0.0, 128
    %1411 = vxpose.xlu0.b32.cont [10/16] 0.0, 128
    %1412 = vxpose.xlu0.b32.cont [11/16] 0.0, 128
    %1413 = vxpose.xlu0.b32.cont [12/16] 0.0, 128
    %1414 = vxpose.xlu0.b32.cont [13/16] 0.0, 128
    %1415 = vxpose.xlu0.b32.cont [14/16] 0.0, 128
    %1416 = vxpose.xlu0.b32.cont [15/16] 0.0, 128
    %1417 = vxpose.xlu0.b32.end [16/16] 0.0, 128
    %v1418 = vpop.trf.xlu0
    %v1419 = vpop.trf.xlu0
    %v1420 = vpop.trf.xlu0
    %v1421 = vpop.trf.xlu0
    %v1422 = vpop.trf.xlu0
    %v1423 = vpop.trf.xlu0
    %v1424 = vpop.trf.xlu0
    %v1425 = vpop.trf.xlu0
    %v1426 = vpop.trf.xlu0
    %v1427 = vpop.trf.xlu0
    %v1428 = vpop.trf.xlu0
    %v1429 = vpop.trf.xlu0
    %v1430 = vpop.trf.xlu0
    %v1431 = vpop.trf.xlu0
    %v1432 = vpop.trf.xlu0
    %v1433 = vpop.trf.xlu0
    %v1435 = vsel %vm280, %v1418, 0
    %v1438 = vsel %vm280, %v1419, 0
    %v1441 = vsel %vm280, %v1420, 0
    %v1444 = vsel %vm280, %v1421, 0
    %v1447 = vsel %vm293, %v1401, 0
    %1449 = vmatprep.subr.mxu0 0.0
    %1450 = vmatpush1.msra.mxu0 %v1447
    %1451 = vmatprep.subr.mxu0 0.0
    %1452 = vmatpush1.msra.mxu0 0.0
    %1453 = vmatprep.subr.mxu0 0.0
    %1454 = vmatpush1.msra.mxu0 0.0
    %1455 = vmatprep.subr.mxu0 0.0
    %1456 = vmatpush1.msra.mxu0 0.0
    %1457 = vmatprep.subr.mxu0 0.0
    %1458 = vmatpush1.msra.mxu0 0.0
    %1459 = vmatprep.subr.mxu0 0.0
    %1460 = vmatpush1.msra.mxu0 0.0
    %1461 = vmatprep.subr.mxu0 0.0
    %1462 = vmatpush1.msra.mxu0 0.0
    %1463 = vmatprep.subr.mxu0 0.0
    %1464 = vmatpush1.msra.mxu0 0.0
    %1465 = vmatprep.subr.mxu0 0.0
    %1466 = vmatpush1.msra.mxu0 0.0
    %1467 = vmatprep.subr.mxu0 0.0
    %1468 = vmatpush1.msra.mxu0 0.0
    %1469 = vmatprep.subr.mxu0 0.0
    %1470 = vmatpush1.msra.mxu0 0.0
    %1471 = vmatprep.subr.mxu0 0.0
    %1472 = vmatpush1.msra.mxu0 0.0
    %1473 = vmatprep.subr.mxu0 0.0
    %1474 = vmatpush1.msra.mxu0 0.0
    %1475 = vmatprep.subr.mxu0 0.0
    %1476 = vmatpush1.msra.mxu0 0.0
    %1477 = vmatprep.subr.mxu0 0.0
    %1478 = vmatpush1.msra.mxu0 0.0
    %1479 = vmatprep.subr.mxu0 0.0
    %1480 = vmatpush1.msra.mxu0 0.0
    %1481 = vmatprep.subr.mxu0 0.0
    %1482 = vmatpush1.msra.mxu0 0.0
    %1483 = vmatprep.subr.mxu0 0.0
    %1484 = vmatpush1.msra.mxu0 0.0
    %1485 = vmatprep.subr.mxu0 0.0
    %1486 = vmatpush1.msra.mxu0 0.0
    %1487 = vmatprep.subr.mxu0 0.0
    %1488 = vmatpush1.msra.mxu0 0.0
    %1489 = vmatprep.subr.mxu0 0.0
    %1490 = vmatpush1.msra.mxu0 0.0
    %1491 = vmatprep.subr.mxu0 0.0
    %1492 = vmatpush1.msra.mxu0 0.0
    %1493 = vmatprep.subr.mxu0 0.0
    %1494 = vmatpush1.msra.mxu0 0.0
    %1495 = vmatprep.subr.mxu0 0.0
    %1496 = vmatpush1.msra.mxu0 0.0
    %1497 = vmatprep.subr.mxu0 0.0
    %1498 = vmatpush1.msra.mxu0 0.0
    %1499 = vmatprep.subr.mxu0 0.0
    %1500 = vmatpush1.msra.mxu0 0.0
    %1501 = vmatprep.subr.mxu0 0.0
    %1502 = vmatpush1.msra.mxu0 0.0
    %1503 = vmatprep.subr.mxu0 0.0
    %1504 = vmatpush1.msra.mxu0 0.0
    %1505 = vmatprep.subr.mxu0 0.0
    %1506 = vmatpush1.msra.mxu0 0.0
    %1507 = vmatprep.subr.mxu0 0.0
    %1508 = vmatpush1.msra.mxu0 0.0
    %1509 = vmatprep.subr.mxu0 0.0
    %1510 = vmatpush1.msra.mxu0 0.0
    %1511 = vmatprep.subr.mxu0 0.0
    %1512 = vmatpush1.msra.mxu0 0.0
    %1513 = vmatprep.mubr.f32.mxu0 0.0
    %1514 = vmatmul.mubr.f32.gmra.mrb[0].mxu0 %v1435
    %v1515 = vpop.f32.mrb[0].mxu0
    %v1516 = vadd.f32 0.0, %v1515
    %v1517 = vpop.f32.mrb[0].mxu0
    %1518 = vmatprep.mubr.f32.mxu0 0.0
    %1519 = vmatmul.mubr.f32.gmra.mrb[0].mxu0 %v1438
    %v1520 = vpop.f32.mrb[0].mxu0
    %v1521 = vadd.f32 0.0, %v1520
    %v1522 = vpop.f32.mrb[0].mxu0
    %1523 = vmatprep.mubr.f32.mxu0 0.0
    %1524 = vmatmul.mubr.f32.gmra.mrb[0].mxu0 %v1441
    %v1525 = vpop.f32.mrb[0].mxu0
    %v1526 = vadd.f32 0.0, %v1525
    %v1527 = vpop.f32.mrb[0].mxu0
    %1528 = vmatprep.mubr.f32.mxu0 0.0
    %1529 = vmatmul.mubr.f32.gmra.mrb[0].mxu0 %v1444
    %v1530 = vpop.f32.mrb[0].mxu0
    %v1531 = vadd.f32 0.0, %v1530
    %v1532 = vpop.f32.mrb[0].mxu0
    %1533 = vdwg.mxu0
    %v1534 = vmul.f32 %v383, %v1159
    %v1535 = vmul.f32 %v383, %v1160
    %v1536 = vmul.f32 %v383, %v1161
    %v1537 = vmul.f32 %v383, %v1162
    %v1538 = vmul.f32 %v388, %v1516
    %v1539 = vmul.f32 %v388, %v1521
    %v1540 = vmul.f32 %v388, %v1526
    %v1541 = vmul.f32 %v388, %v1531
    %v1542 = vadd.f32 %v1534, %v1538
    %v1543 = vadd.f32 %v1535, %v1539
    %v1544 = vadd.f32 %v1536, %v1540
    %v1545 = vadd.f32 %v1537, %v1541
    %1546 = vmatprep.subr.mxu0 0.0
    %1547 = vmatpush1.msra.mxu0 %v67
    %1548 = vmatprep.subr.mxu0 0.0
    %1549 = vmatpush1.msra.mxu0 %v68
    %1550 = vmatprep.subr.mxu0 0.0
    %1551 = vmatpush1.msra.mxu0 %v69
    %1552 = vmatprep.subr.mxu0 0.0
    %1553 = vmatpush1.msra.mxu0 %v70
    %1554 = vmatprep.subr.mxu0 0.0
    %1555 = vmatpush1.msra.mxu0 %v71
    %1556 = vmatprep.subr.mxu0 0.0
    %1557 = vmatpush1.msra.mxu0 %v72
    %1558 = vmatprep.subr.mxu0 0.0
    %1559 = vmatpush1.msra.mxu0 %v73
    %1560 = vmatprep.subr.mxu0 0.0
    %1561 = vmatpush1.msra.mxu0 %v74
    %1562 = vmatprep.subr.mxu0 0.0
    %1563 = vmatpush1.msra.mxu0 %v75
    %1564 = vmatprep.subr.mxu0 0.0
    %1565 = vmatpush1.msra.mxu0 %v76
    %1566 = vmatprep.subr.mxu0 0.0
    %1567 = vmatpush1.msra.mxu0 %v77
    %1568 = vmatprep.subr.mxu0 0.0
    %1569 = vmatpush1.msra.mxu0 %v78
    %1570 = vmatprep.subr.mxu0 0.0
    %1571 = vmatpush1.msra.mxu0 %v79
    %1572 = vmatprep.subr.mxu0 0.0
    %1573 = vmatpush1.msra.mxu0 %v80
    %1574 = vmatprep.subr.mxu0 0.0
    %1575 = vmatpush1.msra.mxu0 %v81
    %1576 = vmatprep.subr.mxu0 0.0
    %1577 = vmatpush1.msra.mxu0 %v82
    %1578 = vmatprep.subr.mxu0 0.0
    %1579 = vmatpush1.msra.mxu0 0.0
    %1580 = vmatprep.subr.mxu0 0.0
    %1581 = vmatpush1.msra.mxu0 0.0
    %1582 = vmatprep.subr.mxu0 0.0
    %1583 = vmatpush1.msra.mxu0 0.0
    %1584 = vmatprep.subr.mxu0 0.0
    %1585 = vmatpush1.msra.mxu0 0.0
    %1586 = vmatprep.subr.mxu0 0.0
    %1587 = vmatpush1.msra.mxu0 0.0
    %1588 = vmatprep.subr.mxu0 0.0
    %1589 = vmatpush1.msra.mxu0 0.0
    %1590 = vmatprep.subr.mxu0 0.0
    %1591 = vmatpush1.msra.mxu0 0.0
    %1592 = vmatprep.subr.mxu0 0.0
    %1593 = vmatpush1.msra.mxu0 0.0
    %1594 = vmatprep.subr.mxu0 0.0
    %1595 = vmatpush1.msra.mxu0 0.0
    %1596 = vmatprep.subr.mxu0 0.0
    %1597 = vmatpush1.msra.mxu0 0.0
    %1598 = vmatprep.subr.mxu0 0.0
    %1599 = vmatpush1.msra.mxu0 0.0
    %1600 = vmatprep.subr.mxu0 0.0
    %1601 = vmatpush1.msra.mxu0 0.0
    %1602 = vmatprep.subr.mxu0 0.0
    %1603 = vmatpush1.msra.mxu0 0.0
    %1604 = vmatprep.subr.mxu0 0.0
    %1605 = vmatpush1.msra.mxu0 0.0
    %1606 = vmatprep.subr.mxu0 0.0
    %1607 = vmatpush1.msra.mxu0 0.0
    %1608 = vmatprep.subr.mxu0 0.0
    %1609 = vmatpush1.msra.mxu0 0.0
    %1610 = vmatprep.mubr.f32.mxu0 0.0
    %1611 = vmatmul.mubr.f32.gmra.mrb[0].mxu0 %v1401
    %v1612 = vpop.f32.mrb[0].mxu0
    %v1613 = vadd.f32 %v83, %v1612
    %v1614 = vpop.f32.mrb[0].mxu0
    %1615 = vdwg.mxu0
    %v1616 = vsel %vm86, %v1613, -1e+30
    %v1617 = vsel %vm293, %v1616, -inf
    %1618 = vmax.xlane.f32.xlu0 %v1617
    %v1619 = vpop.xlane.xlu0 %1618
    %v1620 = vsub.f32 %v1616, %v1619
    %v1621 = vmul.f32 %v1620, 1.442695
    %v1622 = vpow.pop %v1621
    %v1623 = vsel %vm86, %v1622, 0.0
    %v1624 = vsel %vm293, %v1623, 0.0
    %1625 = vadd.xlane.f32.xlu0 %v1624
    %v1626 = vpop.xlane.xlu0 %1625
    %v1627 = vrcp.pop %v1626
    %v1628 = vmul.f32 %v1623, %v1627
    %v1629 = vsel %vm87, %v1613, 0.0
    %v1630 = vsel %vm86, %v1628, %v1629
    %1631 = vst [vmem:[%s10 + $0x3] sm:$0x1] %v1630
    %1632 = vst [vmem:[#allocation3] sm:$0x1] %v1401
    %1633 = vst [vmem:[#allocation5] sm:$0xff] %v1542
    %1634 = vst [vmem:[#allocation5 + $0x8] sm:$0xff] %v1543
    %1635 = vst [vmem:[#allocation5 + $0x10] sm:$0xff] %v1544
    %1636 = vst [vmem:[#allocation5 + $0x18] sm:$0xff] %v1545
    // Predicated region
    $region42: #{plastic_rollout.1} parent=1 // pred_check
      _
    $region43: #{plastic_rollout.1} parent=1 // pred_check_branch
      %1638 = sbr.rel (0) target = $region45
    $region44: #{plastic_rollout.1} parent=1 // pred_region
      _
    $region45: #{plastic_rollout.1} parent=1 // pred_fallthru
      _
    // Predicated region
    $region46: #{plastic_rollout.1} parent=1 // pred_check
      _
    $region47: #{plastic_rollout.1} parent=1 // pred_check_branch
      %1640 = sbr.rel (0) target = $region49
    $region48: #{plastic_rollout.1} parent=1 // pred_region
      %s1642 = ssub.s32 16, 16
      %1643 = vsyncadd [#allocation4], %s1642
      %s1645 = sshll.u32 [#allocation3], 4
      %s1646 = int_to_ptr.vmem [resolvable:$true] %s1645
      %1648 = dma.vmem_to_hbm [thread:$0]  %s1646, 16, %s11, [#allocation4]
    $region49: #{plastic_rollout.1} parent=1 // pred_fallthru
      _
    // Predicated region
    $region50: #{plastic_rollout.1} parent=1 // pred_check
      _
    $region51: #{plastic_rollout.1} parent=1 // pred_check_branch
      %1650 = sbr.rel (0) target = $region53
    $region52: #{plastic_rollout.1} parent=1 // pred_region
      %s1652 = ssub.s32 512, 512
      %1653 = vsyncadd [#allocation6], %s1652
      %s1654 = sshll.u32 [#allocation5], 4
      %s1655 = int_to_ptr.vmem [resolvable:$true] %s1654
      %1660 = dma.vmem_to_hbm [thread:$0]  %s1655, 512, %s12, [#allocation6], 128, 128, 8
    $region53: #{plastic_rollout.1} parent=1 // pred_fallthru
      _
    // Predicated region
    $region54: #{plastic_rollout.1} parent=1 // pred_check
      _
    $region55: #{plastic_rollout.1} parent=1 // pred_check_branch
      %1662 = sbr.rel (0) target = $region57
    $region56: #{plastic_rollout.1} parent=1 // pred_region
      _
    $region57: #{plastic_rollout.1} parent=1 // pred_fallthru
      _
    // Predicated region
    $region58: #{plastic_rollout.1} parent=1 // pred_check
      _
    $region59: #{plastic_rollout.1} parent=1 // pred_check_branch
      %1664 = sbr.rel (0) target = $region61
    $region60: #{plastic_rollout.1} parent=1 // pred_region
      %1665 = dma.done [#allocation4], 16
    $region61: #{plastic_rollout.1} parent=1 // pred_fallthru
      _
    // Predicated region
    $region62: #{plastic_rollout.1} parent=1 // pred_check
      _
    $region63: #{plastic_rollout.1} parent=1 // pred_check_branch
      %1667 = sbr.rel (0) target = $region65
    $region64: #{plastic_rollout.1} parent=1 // pred_region
      %1668 = dma.done [#allocation6], 512
    $region65: #{plastic_rollout.1} parent=1 // pred_fallthru
      _
    %1669 = vsyncpa [#allocation4], 1
    %1670 = vsyncpa [#allocation6], 1

</llo_original>
